<compile_context>
chip_gen: v7x
topology: tpu7x:2x2x1
jax: 0.10.0
libtpu: 0.0.40
codegen_flags: <defaults>
</compile_context>

<pallas_src>
import jax
import jax.numpy as jnp
from jax.experimental import pallas as pl
from jax.experimental.pallas import tpu as pltpu


def _is_16bit_float(dtype) -> bool:
    dt = jnp.dtype(dtype)
    return jnp.issubdtype(dt, jnp.floating) and dt.itemsize <= 2


def iwt_kernel(x_ref, o_ref):
    # x_ref: (4, Cb, H, W)  -- the four sub-bands for Cb output channels
    # o_ref: (Cb, 2H, 2W)   -- final NCHW tile (rows/cols already interleaved)
    _, cb, H, W = x_ref.shape

    # Compute dtype: native for 16-bit float I/O (bf16 VALU on v6e/v7x), f32 else.
    cdt = x_ref.dtype if _is_16bit_float(x_ref.dtype) else jnp.float32
    odt = o_ref.dtype

    x1 = x_ref[0].astype(cdt)
    x2 = x_ref[1].astype(cdt)
    x3 = x_ref[2].astype(cdt)
    x4 = x_ref[3].astype(cdt)

    # Butterfly with the 0.5 scale folded in (0.5 is exact in bf16/f32).
    s14 = (x1 + x4) * 0.5
    d14 = (x1 - x4) * 0.5
    s23 = (x2 + x3) * 0.5
    d23 = (x2 - x3) * 0.5

    # Downcast before the interleave: halves the bytes pushed through the
    # relayout (XLU) and the live VMEM/vreg footprint for 16-bit outputs.
    c00 = (s14 - s23).astype(odt)   # h[0::2, 0::2]
    c01 = (d14 + d23).astype(odt)   # h[0::2, 1::2]
    c10 = (d14 - d23).astype(odt)   # h[1::2, 0::2]
    c11 = (s14 + s23).astype(odt)   # h[1::2, 1::2]

    # Fused parity interleave: rows (sublane) first, then columns (lane) once.
    left = jnp.stack([c00, c10], axis=-2).reshape(cb, 2 * H, W)    # cols 0::2
    right = jnp.stack([c01, c11], axis=-2).reshape(cb, 2 * H, W)   # cols 1::2
    o_ref[...] = jnp.stack([left, right], axis=-1).reshape(cb, 2 * H, 2 * W)


def iwt(x, *, vmem_budget_bytes=24 * 1024 * 1024, min_grid_steps=8):
    B, C4, H, W = x.shape
    assert C4 % 4 == 0, "input channels must be a multiple of 4"
    C = C4 // 4

    io_itemsize = jnp.dtype(x.dtype).itemsize
    compute_itemsize = io_itemsize if _is_16bit_float(x.dtype) else 4

    # --- cb sizing against the TOTAL live footprint per output channel ---
    # In units of (H*W) elements per output channel:
    #   double-buffered pipeline blocks: 2*(input 4 + output 4)     -> 16 * io
    #   butterfly temporaries (x1..x4, s/d, c**), ~10 live          -> 10 * compute
    #   interleave temporaries (cast c**, left/right, out), ~8 live ->  8 * io
    per_channel = H * W * (16 * io_itemsize + 10 * compute_itemsize + 8 * io_itemsize)
    cb = max(1, min(C, vmem_budget_bytes // max(per_channel, 1)))

    # --- grid-step floor: keep enough steps for 2 TCs + pipeline overlap ---
    steps_needed = -(-min_grid_steps // B)          # ceil(min_grid_steps / B)
    cb_cap = C // steps_needed
    cb = min(cb, cb_cap) if cb_cap >= 1 else 1

    # --- divisibility fixup ---
    while C % cb:
        cb -= 1

    grid = (B, C // cb)

    out = pl.pallas_call(
        iwt_kernel,
        out_shape=jax.ShapeDtypeStruct((B, C, 2 * H, 2 * W), x.dtype),
        grid=grid,
        in_specs=[
            pl.BlockSpec((None, 4, cb, H, W), lambda b, c: (b, 0, c, 0, 0)),
        ],
        out_specs=pl.BlockSpec(
            (None, cb, 2 * H, 2 * W), lambda b, c: (b, c, 0, 0)
        ),
        compiler_params=pltpu.CompilerParams(
            dimension_semantics=("parallel", "parallel"),
            vmem_limit_bytes=32 * 1024 * 1024,
        ),
    )(x.reshape(B, 4, C, H, W))
    return out


def iwt_reference(x):
    """Pure-JAX reference mirroring the PyTorch iwt_init."""
    B, C4, H, W = x.shape
    C = C4 // 4
    x1 = x[:, 0:C] / 2
    x2 = x[:, C:2 * C] / 2
    x3 = x[:, 2 * C:3 * C] / 2
    x4 = x[:, 3 * C:4 * C] / 2
    h = jnp.zeros((B, C, 2 * H, 2 * W), x.dtype)
    h = h.at[:, :, 0::2, 0::2].set(x1 - x2 - x3 + x4)
    h = h.at[:, :, 1::2, 0::2].set(x1 - x2 + x3 - x4)
    h = h.at[:, :, 0::2, 1::2].set(x1 + x2 - x3 - x4)
    h = h.at[:, :, 1::2, 1::2].set(x1 + x2 + x3 + x4)
    return h


if __name__ == "__main__":
    key = jax.random.PRNGKey(0)
    # B=2, in_channels=8 (-> out_channels=2), spatial 16x16
    x = jax.random.normal(key, (2, 8, 16, 16), dtype=jnp.float32)

    out = jax.block_until_ready(iwt(x))

    ref = iwt_reference(x)
    assert out.shape == (2, 2, 32, 32), out.shape
    assert jnp.allclose(out, ref, atol=1e-5), float(jnp.max(jnp.abs(out - ref)))

    print("KERNEL_OK")
</pallas_src>

<mosaic_0001>
module attributes {stable_mosaic.version = 11 : i64} {
  func.func @iwt_kernel(%arg0: i32, %arg1: i32, %arg2: memref<1x4x1x16x16xf32, #tpu.memory_space<vmem>>, %arg3: memref<1x1x32x32xf32, #tpu.memory_space<vmem>>) attributes {dimension_semantics = [#tpu.dimension_semantics<parallel>, #tpu.dimension_semantics<parallel>], iteration_bounds = array<i64: 2, 2>, scalar_prefetch = 0 : i64, scratch_operands = 0 : i64, tpu.core_type = #tpu.core_type<tc>, window_params = [{transform_indices = @transform_0, window_bounds = array<i64: 1, 4, 1, 16, 16>}, {transform_indices = @transform_1, window_bounds = array<i64: 1, 1, 32, 32>}]} {
    %c0 = arith.constant 0 : index
    %c0_0 = arith.constant 0 : index
    %c0_1 = arith.constant 0 : index
    %c0_2 = arith.constant 0 : index
    %c0_3 = arith.constant 0 : index
    %0 = vector.load %arg2[%c0, %c0_0, %c0_1, %c0_2, %c0_3] : memref<1x4x1x16x16xf32, #tpu.memory_space<vmem>>, vector<1x1x1x16x16xf32>
    %1 = vector.shape_cast %0 : vector<1x1x1x16x16xf32> to vector<1x16x16xf32>
    %c0_4 = arith.constant 0 : index
    %c1 = arith.constant 1 : index
    %c0_5 = arith.constant 0 : index
    %c0_6 = arith.constant 0 : index
    %c0_7 = arith.constant 0 : index
    %2 = vector.load %arg2[%c0_4, %c1, %c0_5, %c0_6, %c0_7] : memref<1x4x1x16x16xf32, #tpu.memory_space<vmem>>, vector<1x1x1x16x16xf32>
    %3 = vector.shape_cast %2 : vector<1x1x1x16x16xf32> to vector<1x16x16xf32>
    %c0_8 = arith.constant 0 : index
    %c2 = arith.constant 2 : index
    %c0_9 = arith.constant 0 : index
    %c0_10 = arith.constant 0 : index
    %c0_11 = arith.constant 0 : index
    %4 = vector.load %arg2[%c0_8, %c2, %c0_9, %c0_10, %c0_11] : memref<1x4x1x16x16xf32, #tpu.memory_space<vmem>>, vector<1x1x1x16x16xf32>
    %5 = vector.shape_cast %4 : vector<1x1x1x16x16xf32> to vector<1x16x16xf32>
    %c0_12 = arith.constant 0 : index
    %c3 = arith.constant 3 : index
    %c0_13 = arith.constant 0 : index
    %c0_14 = arith.constant 0 : index
    %c0_15 = arith.constant 0 : index
    %6 = vector.load %arg2[%c0_12, %c3, %c0_13, %c0_14, %c0_15] : memref<1x4x1x16x16xf32, #tpu.memory_space<vmem>>, vector<1x1x1x16x16xf32>
    %7 = vector.shape_cast %6 : vector<1x1x1x16x16xf32> to vector<1x16x16xf32>
    %8 = arith.addf %1, %7 : vector<1x16x16xf32>
    %cst = arith.constant 5.000000e-01 : f32
    %9 = vector.broadcast %cst : f32 to vector<1x16x16xf32>
    %10 = arith.mulf %8, %9 : vector<1x16x16xf32>
    %11 = arith.subf %1, %7 : vector<1x16x16xf32>
    %cst_16 = arith.constant 5.000000e-01 : f32
    %12 = vector.broadcast %cst_16 : f32 to vector<1x16x16xf32>
    %13 = arith.mulf %11, %12 : vector<1x16x16xf32>
    %14 = arith.addf %3, %5 : vector<1x16x16xf32>
    %cst_17 = arith.constant 5.000000e-01 : f32
    %15 = vector.broadcast %cst_17 : f32 to vector<1x16x16xf32>
    %16 = arith.mulf %14, %15 : vector<1x16x16xf32>
    %17 = arith.subf %3, %5 : vector<1x16x16xf32>
    %cst_18 = arith.constant 5.000000e-01 : f32
    %18 = vector.broadcast %cst_18 : f32 to vector<1x16x16xf32>
    %19 = arith.mulf %17, %18 : vector<1x16x16xf32>
    %20 = arith.subf %10, %16 : vector<1x16x16xf32>
    %21 = arith.addf %13, %19 : vector<1x16x16xf32>
    %22 = arith.subf %13, %19 : vector<1x16x16xf32>
    %23 = arith.addf %10, %16 : vector<1x16x16xf32>
    %24 = vector.shape_cast %20 : vector<1x16x16xf32> to vector<1x16x1x16xf32>
    %25 = vector.shape_cast %22 : vector<1x16x16xf32> to vector<1x16x1x16xf32>
    %26 = tpu.concatenate %24, %25 in 2 : vector<1x16x1x16xf32>, vector<1x16x1x16xf32> -> vector<1x16x2x16xf32>
    %27 = vector.shape_cast %26 : vector<1x16x2x16xf32> to vector<1x32x16xf32>
    %28 = vector.shape_cast %21 : vector<1x16x16xf32> to vector<1x16x1x16xf32>
    %29 = vector.shape_cast %23 : vector<1x16x16xf32> to vector<1x16x1x16xf32>
    %30 = tpu.concatenate %28, %29 in 2 : vector<1x16x1x16xf32>, vector<1x16x1x16xf32> -> vector<1x16x2x16xf32>
    %31 = vector.shape_cast %30 : vector<1x16x2x16xf32> to vector<1x32x16xf32>
    %32 = vector.shape_cast %27 : vector<1x32x16xf32> to vector<1x32x16x1xf32>
    %33 = vector.shape_cast %31 : vector<1x32x16xf32> to vector<1x32x16x1xf32>
    %34 = tpu.concatenate %32, %33 in 3 : vector<1x32x16x1xf32>, vector<1x32x16x1xf32> -> vector<1x32x16x2xf32>
    %35 = vector.shape_cast %34 : vector<1x32x16x2xf32> to vector<1x32x32xf32>
    %c0_19 = arith.constant 0 : index
    %c0_20 = arith.constant 0 : index
    %c0_21 = arith.constant 0 : index
    %c0_22 = arith.constant 0 : index
    %36 = vector.load %arg3[%c0_19, %c0_20, %c0_21, %c0_22] : memref<1x1x32x32xf32, #tpu.memory_space<vmem>>, vector<1x1x32x32xf32>
    %37 = vector.shape_cast %36 : vector<1x1x32x32xf32> to vector<1x32x32xf32>
    %38 = vector.shape_cast %35 : vector<1x32x32xf32> to vector<1x1x32x32xf32>
    tpu.vector_store %arg3[%c0_19, %c0_20, %c0_21, %c0_22], %38 {strides = array<i32>} : memref<1x1x32x32xf32, #tpu.memory_space<vmem>>, vector<1x1x32x32xf32>,
    return
  }
  func.func @transform_0(%arg0: i32, %arg1: i32) -> (i32, i32, i32, i32, i32) {
    %c0_i32 = arith.constant 0 : i32
    %c0_i32_0 = arith.constant 0 : i32
    %c0_i32_1 = arith.constant 0 : i32
    %c0_i32_2 = arith.constant 0 : i32
    return %arg0, %c0_i32, %arg1, %c0_i32_0, %c0_i32_1 : i32, i32, i32, i32, i32
  }
  func.func @transform_1(%arg0: i32, %arg1: i32) -> (i32, i32, i32, i32) {
    %c0_i32 = arith.constant 0 : i32
    %c0_i32_0 = arith.constant 0 : i32
    %c0_i32_1 = arith.constant 0 : i32
    return %arg0, %arg1, %c0_i32, %c0_i32_0 : i32, i32, i32, i32
  }
}

</mosaic_0001>

<llo_original>
// kernel: tpu_custom_call.1
$region0: #{tpu_custom_call.1}
  #allocation0 [shape = 'u32[]', space=smem, size = 0x4, offset = 0x4, fixed_abs, tag = 'smem constant byte address 0x4 - core index']
  #allocation1 [shape = 'u32[144,128]{1,0:T(1,128)}', space=vmem, size = 0x12000, scoped, tag = 'internal scratch']
  #allocation6 [shape = 's32[]', space=sflag, size = 0x4, offset = 0, fixed_abs, tag = 'sflag constant byte address 0x0 - dummy sync flag']
  %s0 = inlined_call_operand.hbm [shape: f32[2,4,2,16,16], index: 0, kind: input, shape index: {}]
  %s1 = inlined_call_operand.hbm [shape: f32[2,2,32,32], index: 1, kind: output, shape index: {}]
  %s2 = sld [smem:[#allocation0]]
  $region41: #{tpu_custom_call.1} parent=0
    _
  %s4 = ssub.s32 1, %s2
  %s5 = scalar_select 0, %s4, %s2
  $region1: #{tpu_custom_call.1} parent=0
    #allocation2 [shape = 'u8[65536]{0}', space=vmem, size = 0x10000, scoped, tag = 'input window, operand 0']
    #allocation3 [shape = 's32[2]{0}', space=sflag, size = 0x8, scoped, tag = 'scoped memory for tpu_custom_call.1']
    #allocation4 [shape = 's32[2]{0}', space=sflag, size = 0x8, scoped, tag = 'scoped memory for tpu_custom_call.1']
    #allocation5 [shape = 'u8[32768]{0}', space=vmem, size = 0x8000, scoped, tag = 'output window, operand 0']
    %6 = vsyncpa [#allocation3], 0
    %s7 = scalar_lea.sflag [#allocation3], 1
    %8 = vsyncpa %s7, 0
    %9 = vsyncpa [#allocation4], 0
    %s10 = scalar_lea.sflag [#allocation4], 1
    %11 = vsyncpa %s10, 0
    loop: start=0, step=1, limit=6
    $region2: #{tpu_custom_call.1} parent=1 // loop_pre_header
      _
    $region3: #{tpu_custom_call.1} parent=1 // loop_header
      %s13 = sphi 0, %s17
      %p14 = scmp.ge.s32.totalorder %s13, 6
      %s20 = sphi 0, %s32
      %s21 = sphi 0, %s28
      %s22 = sphi 0, %s20
      %s23 = sphi 0, %s21
      %s24 = sphi 0, %s22
      %s25 = sphi 0, %s23
      %s37 = sphi 0, %s39
      %s40 = sphi 0, %s37
      %s41 = sphi 0, %s40
      %s57 = sphi 0, %s41
      %s65 = sphi 0, %s67
      %s68 = sphi 0, %s65
      %s69 = sphi 0, %s68
      %s85 = sphi 0, %s69
    $region4: #{tpu_custom_call.1} parent=1 // loop_header_branch
      %16 = sbr.rel (%p14) target = $region8
    $region5: #{tpu_custom_call.1} parent=1 // loop_body
      %s18 = ssub.s32 %s13, 1
      %s19 = ssub.s32 %s13, 2
      %s26 = sadd.s32 1, %s21
      %p27 = scmp.ge.s32.totalorder %s26, 2
      %s28 = scalar_select %p27, 0, %s26
      %s29 = sadd.s32 1, %s20
      %s30 = scalar_select %p27, %s29, %s20
      %p31 = scmp.ge.s32.totalorder %s30, 2
      %s32 = scalar_select %p31, 0, %s30
      %s33 = ssub.s32 %s20, %s32
      %s34 = ssub.s32 %s21, %s28
      %s35 = sor.u32 %s33, %s34
      %p36 = scmp.eq.s32.totalorder %s35, 0
      %s38 = sadd.s32 %s37, 1
      %s39 = scalar_select %p36, %s37, %s38
      %p42 = pneg %p36
      %p43 = scmp.eq.s32.totalorder %s13, 3
      %p44 = por %p42, %p43
      %p45 = scmp.ne.s32.totalorder %s37, %s40
      %p46 = scmp.eq.s32.totalorder %s13, 0
      %p47 = por %p45, %p46
      %p48 = scmp.ne.s32.totalorder %s37, %s40
      %p49 = scmp.eq.s32.totalorder %s18, 3
      %p50 = por %p48, %p49
      %p51 = scmp.ne.s32.totalorder %s40, %s41
      %p52 = scmp.eq.s32.totalorder %s18, 0
      %p53 = por %p51, %p52
      %p54 = scmp.ne.s32.totalorder %s40, %s41
      %p55 = scmp.eq.s32.totalorder %s19, 3
      %p56 = por %p54, %p55
      %p58 = scmp.ne.s32.totalorder %s41, %s57
      %p59 = scmp.eq.s32.totalorder %s19, 0
      %p60 = por %p58, %p59
      %s61 = ssub.s32 %s20, %s32
      %s62 = ssub.s32 %s21, %s28
      %s63 = sor.u32 %s61, %s62
      %p64 = scmp.eq.s32.totalorder %s63, 0
      %s66 = sadd.s32 %s65, 1
      %s67 = scalar_select %p64, %s65, %s66
      %p70 = pneg %p64
      %p71 = scmp.eq.s32.totalorder %s13, 3
      %p72 = por %p70, %p71
      %p73 = scmp.ne.s32.totalorder %s65, %s68
      %p74 = scmp.eq.s32.totalorder %s13, 0
      %p75 = por %p73, %p74
      %p76 = scmp.ne.s32.totalorder %s65, %s68
      %p77 = scmp.eq.s32.totalorder %s18, 3
      %p78 = por %p76, %p77
      %p79 = scmp.ne.s32.totalorder %s68, %s69
      %p80 = scmp.eq.s32.totalorder %s18, 0
      %p81 = por %p79, %p80
      %p82 = scmp.ne.s32.totalorder %s68, %s69
      %p83 = scmp.eq.s32.totalorder %s19, 3
      %p84 = por %p82, %p83
      %p86 = scmp.ne.s32.totalorder %s69, %s85
      %p87 = scmp.eq.s32.totalorder %s19, 0
      %p88 = por %p86, %p87
      %p89 = scmp.le.s32.totalorder 1, %s13
      %p90 = scmp.lt.s32.totalorder %s13, 5
      %p91 = pnand %p89, %p90
      %p92 = pneg %p91
      // Predicated region
      $region9: #{tpu_custom_call.1} parent=5 // pred_check
        _
      $region10: #{tpu_custom_call.1} parent=5 // pred_check_branch
        %94 = sbr.rel (%p91) target = $region12
      $region11: #{tpu_custom_call.1} parent=5 // pred_region
        %s95 = ssub.s32 %s13, 1
      $region12: #{tpu_custom_call.1} parent=5 // pred_fallthru
        _
      %p96 = scmp.lt.s32.totalorder %s13, 4
      // Predicated region
      $region13: #{tpu_custom_call.1} parent=5 // pred_check
        %p97 = pneg %p96
      $region14: #{tpu_custom_call.1} parent=5 // pred_check_branch
        %99 = sbr.rel (%p97) target = $region16
      $region15: #{tpu_custom_call.1} parent=5 // pred_region
        // Predicated region
        $region17: #{tpu_custom_call.1} parent=15 // pred_check
          %p100 = pneg %p47
        $region18: #{tpu_custom_call.1} parent=15 // pred_check_branch
          %102 = sbr.rel (%p100) target = $region20
        $region19: #{tpu_custom_call.1} parent=15 // pred_region
          #allocation7 [shape = 'u32[6]{0}', space=smem, size = 0x18, scoped, tag = 'DMA stride descriptor']
          %s103 = sand.u32 %s37, 1
          %s104 = scalar_lea.sflag [#allocation3], %s103
          %s105 = sand.u32 %s37, 1
          %s106 = smul.addr %s105, 64
          %s107 = scalar_lea.vmem [#allocation2], %s106
          %s109 = ssub.s32 1024, 1024
          %110 = vsyncadd %s104, %s109
          %s111 = smul.addr %s21, 2
          %s112 = smul.addr %s20, 16
          %s113 = sadd.s32 %s111, %s112
          %s114 = smul.addr %s113, 128
          %s115 = scalar_lea.hbm %s0, %s114
          %s117 = sshll.u32 1, 14
          %s118 = sxor.u32 4294967295, %s117
          %s120 = sld [smem:[#allocation0]]
          %s121 = sadd.s32 2, %s120
          %s123 = sshll.u32 7, 26
          %s124 = sxor.u32 4294967295, %s123
          %s125 = sand.u32 0, %s124
          %s126 = sshll.u32 %s121, 26
          %s127 = sor.u32 %s125, %s126
          %s128 = sshll.u32 %s107, 4
          %s129 = int_to_ptr.vmem [resolvable:$true] %s128
          %135 = sst [smem:[#allocation7]] 512
          %s136 = scalar_lea.smem [#allocation7], 1
          %137 = sst [smem:[%s136]] 256
          %s138 = scalar_lea.smem [#allocation7], 2
          %139 = sst [smem:[%s138]] 2
          %s140 = scalar_lea.smem [#allocation7], 3
          %141 = sst [smem:[%s140]] 128
          %s142 = scalar_lea.smem [#allocation7], 4
          %143 = sst [smem:[%s142]] 128
          %s144 = scalar_lea.smem [#allocation7], 5
          %145 = sst [smem:[%s144]] 8
          %147 = dma.general %s115, 1024, %s129, %s104, [#allocation6], [#allocation7], %s127, 0
        $region20: #{tpu_custom_call.1} parent=15 // pred_fallthru
          _
      $region16: #{tpu_custom_call.1} parent=5 // pred_fallthru
        _
      %p148 = scmp.le.s32.totalorder 1, %s13
      %p149 = scmp.lt.s32.totalorder %s13, 5
      %p150 = pnand %p148, %p149
      %p151 = pneg %p150
      // Predicated region
      $region21: #{tpu_custom_call.1} parent=5 // pred_check
        _
      $region22: #{tpu_custom_call.1} parent=5 // pred_check_branch
        %153 = sbr.rel (%p150) target = $region24
      $region23: #{tpu_custom_call.1} parent=5 // pred_region
        %s154 = ssub.s32 %s13, 1
        %s155 = sand.u32 %s40, 1
        %s156 = scalar_lea.sflag [#allocation3], %s155
        %s157 = sand.u32 %s40, 1
        %s158 = smul.addr %s157, 64
        %s159 = scalar_lea.vmem [#allocation2], %s158
        // Predicated region
        $region25: #{tpu_custom_call.1} parent=23 // pred_check
          %p160 = pneg %p53
        $region26: #{tpu_custom_call.1} parent=23 // pred_check_branch
          %162 = sbr.rel (%p160) target = $region28
        $region27: #{tpu_custom_call.1} parent=23 // pred_region
          %163 = dma.done %s156, 1024
        $region28: #{tpu_custom_call.1} parent=23 // pred_fallthru
          _
        %s164 = sand.u32 %s40, 1
        %s165 = scalar_lea.sflag [#allocation3], %s164
        %s166 = sand.u32 %s40, 1
        %s167 = smul.addr %s166, 64
        %s168 = scalar_lea.vmem [#allocation2], %s167
        %p169 = pneg %p53
        %p170 = pneg %p50
        %p171 = pneg %p81
        %p172 = pneg %p78
        %s173 = sand.u32 %s68, 1
        %s174 = scalar_lea.sflag [#allocation4], %s173
        %s175 = sand.u32 %s68, 1
        %s176 = smul.addr %s175, 32
        %s177 = scalar_lea.vmem [#allocation5], %s176
        %v178 = vld [vmem:[%s159] sm:$0xff]
        %v179 = vld [vmem:[%s159 + $0x8] sm:$0xff]
        %s180 = scalar_lea.vmem %s159, 16 [#allocation2]
        %v181 = vld [vmem:[%s180] sm:$0xff]
        %v182 = vld [vmem:[%s180 + $0x8] sm:$0xff]
        %s183 = scalar_lea.vmem %s159, 32 [#allocation2]
        %v184 = vld [vmem:[%s183] sm:$0xff]
        %v185 = vld [vmem:[%s183 + $0x8] sm:$0xff]
        %s186 = scalar_lea.vmem %s159, 48 [#allocation2]
        %v187 = vld [vmem:[%s186] sm:$0xff]
        %v188 = vld [vmem:[%s186 + $0x8] sm:$0xff]
        %v189 = vadd.f32 %v178, %v187
        %v190 = vadd.f32 %v179, %v188
        %v191 = vmul.f32 %v189, 0.5
        %v192 = vmul.f32 %v190, 0.5
        %v193 = vsub.f32 %v178, %v187
        %v194 = vsub.f32 %v179, %v188
        %v195 = vmul.f32 %v193, 0.5
        %v196 = vmul.f32 %v194, 0.5
        %v197 = vadd.f32 %v181, %v184
        %v198 = vadd.f32 %v182, %v185
        %v199 = vmul.f32 %v197, 0.5
        %v200 = vmul.f32 %v198, 0.5
        %v201 = vsub.f32 %v181, %v184
        %v202 = vsub.f32 %v182, %v185
        %v203 = vmul.f32 %v201, 0.5
        %v204 = vmul.f32 %v202, 0.5
        %v205 = vsub.f32 %v191, %v199
        %v206 = vsub.f32 %v192, %v200
        %v207 = vadd.f32 %v195, %v203
        %v208 = vadd.f32 %v196, %v204
        %v209 = vsub.f32 %v195, %v203
        %v210 = vsub.f32 %v196, %v204
        %v211 = vadd.f32 %v191, %v199
        %v212 = vadd.f32 %v192, %v200
        %v215 = vcombine.high %v205, %v205
        %v217 = vunpack.c.l.s4 1966171168
        %v218 = vunpack.c.0.s8 %v217
        %v219 = vlaneseq
        %v220 = vshrl.u32 %v219, 7
        %v221 = vsub.s32 %v218, %v220
        %v222 = vrot.slane %v205, %v221
        %v224 = vunpack.c.l.s4 1966171168
        %v225 = vunpack.c.0.s8 %v224
        %v226 = vlaneseq
        %v227 = vshrl.u32 %v226, 7
        %v228 = vsub.s32 %v225, %v227
        %v229 = vrot.slane %v215, %v228
        %v230 = vcombine.high %v222, %v222
        %v231 = vcombine.high %v229, %v229
        %v233 = vunpack.c.l.s4 1966171168
        %v234 = vunpack.c.0.s8 %v233
        %v235 = vlaneseq
        %v236 = vshrl.u32 %v235, 7
        %v237 = vsub.s32 %v234, %v236
        %v238 = vrot.slane %v222, %v237
        %v240 = vunpack.c.l.s4 1966171168
        %v241 = vunpack.c.0.s8 %v240
        %v242 = vlaneseq
        %v243 = vshrl.u32 %v242, 7
        %v244 = vsub.s32 %v241, %v243
        %v245 = vrot.slane %v229, %v244
        %v247 = vunpack.c.l.s4 1966171168
        %v248 = vunpack.c.0.s8 %v247
        %v249 = vlaneseq
        %v250 = vshrl.u32 %v249, 7
        %v251 = vsub.s32 %v248, %v250
        %v252 = vrot.slane %v230, %v251
        %v254 = vunpack.c.l.s4 1966171168
        %v255 = vunpack.c.0.s8 %v254
        %v256 = vlaneseq
        %v257 = vshrl.u32 %v256, 7
        %v258 = vsub.s32 %v255, %v257
        %v259 = vrot.slane %v231, %v258
        %v260 = vcombine.high %v238, %v238
        %v261 = vcombine.high %v245, %v245
        %v262 = vcombine.high %v252, %v252
        %v263 = vcombine.high %v259, %v259
        %v264 = vcombine.high %v206, %v206
        %v266 = vunpack.c.l.s4 1966171168
        %v267 = vunpack.c.0.s8 %v266
        %v268 = vlaneseq
        %v269 = vshrl.u32 %v268, 7
        %v270 = vsub.s32 %v267, %v269
        %v271 = vrot.slane %v206, %v270
        %v273 = vunpack.c.l.s4 1966171168
        %v274 = vunpack.c.0.s8 %v273
        %v275 = vlaneseq
        %v276 = vshrl.u32 %v275, 7
        %v277 = vsub.s32 %v274, %v276
        %v278 = vrot.slane %v264, %v277
        %v279 = vcombine.high %v271, %v271
        %v280 = vcombine.high %v278, %v278
        %v282 = vunpack.c.l.s4 1966171168
        %v283 = vunpack.c.0.s8 %v282
        %v284 = vlaneseq
        %v285 = vshrl.u32 %v284, 7
        %v286 = vsub.s32 %v283, %v285
        %v287 = vrot.slane %v271, %v286
        %v289 = vunpack.c.l.s4 1966171168
        %v290 = vunpack.c.0.s8 %v289
        %v291 = vlaneseq
        %v292 = vshrl.u32 %v291, 7
        %v293 = vsub.s32 %v290, %v292
        %v294 = vrot.slane %v278, %v293
        %v296 = vunpack.c.l.s4 1966171168
        %v297 = vunpack.c.0.s8 %v296
        %v298 = vlaneseq
        %v299 = vshrl.u32 %v298, 7
        %v300 = vsub.s32 %v297, %v299
        %v301 = vrot.slane %v279, %v300
        %v303 = vunpack.c.l.s4 1966171168
        %v304 = vunpack.c.0.s8 %v303
        %v305 = vlaneseq
        %v306 = vshrl.u32 %v305, 7
        %v307 = vsub.s32 %v304, %v306
        %v308 = vrot.slane %v280, %v307
        %v309 = vcombine.high %v287, %v287
        %v310 = vcombine.high %v294, %v294
        %v311 = vcombine.high %v301, %v301
        %v312 = vcombine.high %v308, %v308
        %v331 = vcombine.high %v209, %v209
        %v333 = vunpack.c.l.s4 1966171168
        %v334 = vunpack.c.0.s8 %v333
        %v335 = vlaneseq
        %v336 = vshrl.u32 %v335, 7
        %v337 = vsub.s32 %v334, %v336
        %v338 = vrot.slane %v209, %v337
        %v340 = vunpack.c.l.s4 1966171168
        %v341 = vunpack.c.0.s8 %v340
        %v342 = vlaneseq
        %v343 = vshrl.u32 %v342, 7
        %v344 = vsub.s32 %v341, %v343
        %v345 = vrot.slane %v331, %v344
        %v346 = vcombine.high %v338, %v338
        %v347 = vcombine.high %v345, %v345
        %v349 = vunpack.c.l.s4 1966171168
        %v350 = vunpack.c.0.s8 %v349
        %v351 = vlaneseq
        %v352 = vshrl.u32 %v351, 7
        %v353 = vsub.s32 %v350, %v352
        %v354 = vrot.slane %v338, %v353
        %v356 = vunpack.c.l.s4 1966171168
        %v357 = vunpack.c.0.s8 %v356
        %v358 = vlaneseq
        %v359 = vshrl.u32 %v358, 7
        %v360 = vsub.s32 %v357, %v359
        %v361 = vrot.slane %v345, %v360
        %v363 = vunpack.c.l.s4 1966171168
        %v364 = vunpack.c.0.s8 %v363
        %v365 = vlaneseq
        %v366 = vshrl.u32 %v365, 7
        %v367 = vsub.s32 %v364, %v366
        %v368 = vrot.slane %v346, %v367
        %v370 = vunpack.c.l.s4 1966171168
        %v371 = vunpack.c.0.s8 %v370
        %v372 = vlaneseq
        %v373 = vshrl.u32 %v372, 7
        %v374 = vsub.s32 %v371, %v373
        %v375 = vrot.slane %v347, %v374
        %v376 = vcombine.high %v354, %v354
        %v377 = vcombine.high %v361, %v361
        %v378 = vcombine.high %v368, %v368
        %v379 = vcombine.high %v375, %v375
        %v380 = vcombine.high %v210, %v210
        %v382 = vunpack.c.l.s4 1966171168
        %v383 = vunpack.c.0.s8 %v382
        %v384 = vlaneseq
        %v385 = vshrl.u32 %v384, 7
        %v386 = vsub.s32 %v383, %v385
        %v387 = vrot.slane %v210, %v386
        %v389 = vunpack.c.l.s4 1966171168
        %v390 = vunpack.c.0.s8 %v389
        %v391 = vlaneseq
        %v392 = vshrl.u32 %v391, 7
        %v393 = vsub.s32 %v390, %v392
        %v394 = vrot.slane %v380, %v393
        %v395 = vcombine.high %v387, %v387
        %v396 = vcombine.high %v394, %v394
        %v398 = vunpack.c.l.s4 1966171168
        %v399 = vunpack.c.0.s8 %v398
        %v400 = vlaneseq
        %v401 = vshrl.u32 %v400, 7
        %v402 = vsub.s32 %v399, %v401
        %v403 = vrot.slane %v387, %v402
        %v405 = vunpack.c.l.s4 1966171168
        %v406 = vunpack.c.0.s8 %v405
        %v407 = vlaneseq
        %v408 = vshrl.u32 %v407, 7
        %v409 = vsub.s32 %v406, %v408
        %v410 = vrot.slane %v394, %v409
        %v412 = vunpack.c.l.s4 1966171168
        %v413 = vunpack.c.0.s8 %v412
        %v414 = vlaneseq
        %v415 = vshrl.u32 %v414, 7
        %v416 = vsub.s32 %v413, %v415
        %v417 = vrot.slane %v395, %v416
        %v419 = vunpack.c.l.s4 1966171168
        %v420 = vunpack.c.0.s8 %v419
        %v421 = vlaneseq
        %v422 = vshrl.u32 %v421, 7
        %v423 = vsub.s32 %v420, %v422
        %v424 = vrot.slane %v396, %v423
        %v425 = vcombine.high %v403, %v403
        %v426 = vcombine.high %v410, %v410
        %v427 = vcombine.high %v417, %v417
        %v428 = vcombine.high %v424, %v424
        %v429 = vlaneseq
        %v430 = vshrl.u32 %v429, 7
        %v431 = vsub.s32 0, %v430
        %v432 = vrot.slane %v354, %v431
        %v433 = vlaneseq
        %v434 = vshrl.u32 %v433, 7
        %v435 = vsub.s32 0, %v434
        %v436 = vrot.slane %v368, %v435
        %v437 = vlaneseq
        %v438 = vshrl.u32 %v437, 7
        %v439 = vsub.s32 0, %v438
        %v440 = vrot.slane %v376, %v439
        %v441 = vlaneseq
        %v442 = vshrl.u32 %v441, 7
        %v443 = vsub.s32 0, %v442
        %v444 = vrot.slane %v378, %v443
        %v445 = vlaneseq
        %v446 = vshrl.u32 %v445, 7
        %v447 = vsub.s32 0, %v446
        %v448 = vrot.slane %v361, %v447
        %v449 = vlaneseq
        %v450 = vshrl.u32 %v449, 7
        %v451 = vsub.s32 0, %v450
        %v452 = vrot.slane %v375, %v451
        %v453 = vlaneseq
        %v454 = vshrl.u32 %v453, 7
        %v455 = vsub.s32 0, %v454
        %v456 = vrot.slane %v377, %v455
        %v457 = vlaneseq
        %v458 = vshrl.u32 %v457, 7
        %v459 = vsub.s32 0, %v458
        %v460 = vrot.slane %v379, %v459
        %v461 = vlaneseq
        %v462 = vshrl.u32 %v461, 7
        %v463 = vsub.s32 0, %v462
        %v464 = vrot.slane %v403, %v463
        %v465 = vlaneseq
        %v466 = vshrl.u32 %v465, 7
        %v467 = vsub.s32 0, %v466
        %v468 = vrot.slane %v417, %v467
        %v469 = vlaneseq
        %v470 = vshrl.u32 %v469, 7
        %v471 = vsub.s32 0, %v470
        %v472 = vrot.slane %v425, %v471
        %v473 = vlaneseq
        %v474 = vshrl.u32 %v473, 7
        %v475 = vsub.s32 0, %v474
        %v476 = vrot.slane %v427, %v475
        %v477 = vlaneseq
        %v478 = vshrl.u32 %v477, 7
        %v479 = vsub.s32 0, %v478
        %v480 = vrot.slane %v410, %v479
        %v481 = vlaneseq
        %v482 = vshrl.u32 %v481, 7
        %v483 = vsub.s32 0, %v482
        %v484 = vrot.slane %v424, %v483
        %v485 = vlaneseq
        %v486 = vshrl.u32 %v485, 7
        %v487 = vsub.s32 0, %v486
        %v488 = vrot.slane %v426, %v487
        %v489 = vlaneseq
        %v490 = vshrl.u32 %v489, 7
        %v491 = vsub.s32 0, %v490
        %v492 = vrot.slane %v428, %v491
        %vm509 = vcmask 1040384
        %v510 = vsel %vm509, %v238, %v432
        %v511 = vsel %vm509, %v252, %v436
        %v512 = vsel %vm509, %v260, %v440
        %v513 = vsel %vm509, %v262, %v444
        %v514 = vsel %vm509, %v245, %v448
        %v515 = vsel %vm509, %v259, %v452
        %v516 = vsel %vm509, %v261, %v456
        %v517 = vsel %vm509, %v263, %v460
        %v518 = vsel %vm509, %v287, %v464
        %v519 = vsel %vm509, %v301, %v468
        %v520 = vsel %vm509, %v309, %v472
        %v521 = vsel %vm509, %v311, %v476
        %v522 = vsel %vm509, %v294, %v480
        %v523 = vsel %vm509, %v308, %v484
        %v524 = vsel %vm509, %v310, %v488
        %v525 = vsel %vm509, %v312, %v492
        %v528 = vcombine.high %v207, %v207
        %v530 = vunpack.c.l.s4 1966171168
        %v531 = vunpack.c.0.s8 %v530
        %v532 = vlaneseq
        %v533 = vshrl.u32 %v532, 7
        %v534 = vsub.s32 %v531, %v533
        %v535 = vrot.slane %v207, %v534
        %v537 = vunpack.c.l.s4 1966171168
        %v538 = vunpack.c.0.s8 %v537
        %v539 = vlaneseq
        %v540 = vshrl.u32 %v539, 7
        %v541 = vsub.s32 %v538, %v540
        %v542 = vrot.slane %v528, %v541
        %v543 = vcombine.high %v535, %v535
        %v544 = vcombine.high %v542, %v542
        %v546 = vunpack.c.l.s4 1966171168
        %v547 = vunpack.c.0.s8 %v546
        %v548 = vlaneseq
        %v549 = vshrl.u32 %v548, 7
        %v550 = vsub.s32 %v547, %v549
        %v551 = vrot.slane %v535, %v550
        %v553 = vunpack.c.l.s4 1966171168
        %v554 = vunpack.c.0.s8 %v553
        %v555 = vlaneseq
        %v556 = vshrl.u32 %v555, 7
        %v557 = vsub.s32 %v554, %v556
        %v558 = vrot.slane %v542, %v557
        %v560 = vunpack.c.l.s4 1966171168
        %v561 = vunpack.c.0.s8 %v560
        %v562 = vlaneseq
        %v563 = vshrl.u32 %v562, 7
        %v564 = vsub.s32 %v561, %v563
        %v565 = vrot.slane %v543, %v564
        %v567 = vunpack.c.l.s4 1966171168
        %v568 = vunpack.c.0.s8 %v567
        %v569 = vlaneseq
        %v570 = vshrl.u32 %v569, 7
        %v571 = vsub.s32 %v568, %v570
        %v572 = vrot.slane %v544, %v571
        %v573 = vcombine.high %v551, %v551
        %v574 = vcombine.high %v558, %v558
        %v575 = vcombine.high %v565, %v565
        %v576 = vcombine.high %v572, %v572
        %v577 = vcombine.high %v208, %v208
        %v579 = vunpack.c.l.s4 1966171168
        %v580 = vunpack.c.0.s8 %v579
        %v581 = vlaneseq
        %v582 = vshrl.u32 %v581, 7
        %v583 = vsub.s32 %v580, %v582
        %v584 = vrot.slane %v208, %v583
        %v586 = vunpack.c.l.s4 1966171168
        %v587 = vunpack.c.0.s8 %v586
        %v588 = vlaneseq
        %v589 = vshrl.u32 %v588, 7
        %v590 = vsub.s32 %v587, %v589
        %v591 = vrot.slane %v577, %v590
        %v592 = vcombine.high %v584, %v584
        %v593 = vcombine.high %v591, %v591
        %v595 = vunpack.c.l.s4 1966171168
        %v596 = vunpack.c.0.s8 %v595
        %v597 = vlaneseq
        %v598 = vshrl.u32 %v597, 7
        %v599 = vsub.s32 %v596, %v598
        %v600 = vrot.slane %v584, %v599
        %v602 = vunpack.c.l.s4 1966171168
        %v603 = vunpack.c.0.s8 %v602
        %v604 = vlaneseq
        %v605 = vshrl.u32 %v604, 7
        %v606 = vsub.s32 %v603, %v605
        %v607 = vrot.slane %v591, %v606
        %v609 = vunpack.c.l.s4 1966171168
        %v610 = vunpack.c.0.s8 %v609
        %v611 = vlaneseq
        %v612 = vshrl.u32 %v611, 7
        %v613 = vsub.s32 %v610, %v612
        %v614 = vrot.slane %v592, %v613
        %v616 = vunpack.c.l.s4 1966171168
        %v617 = vunpack.c.0.s8 %v616
        %v618 = vlaneseq
        %v619 = vshrl.u32 %v618, 7
        %v620 = vsub.s32 %v617, %v619
        %v621 = vrot.slane %v593, %v620
        %v622 = vcombine.high %v600, %v600
        %v623 = vcombine.high %v607, %v607
        %v624 = vcombine.high %v614, %v614
        %v625 = vcombine.high %v621, %v621
        %v644 = vcombine.high %v211, %v211
        %v646 = vunpack.c.l.s4 1966171168
        %v647 = vunpack.c.0.s8 %v646
        %v648 = vlaneseq
        %v649 = vshrl.u32 %v648, 7
        %v650 = vsub.s32 %v647, %v649
        %v651 = vrot.slane %v211, %v650
        %v653 = vunpack.c.l.s4 1966171168
        %v654 = vunpack.c.0.s8 %v653
        %v655 = vlaneseq
        %v656 = vshrl.u32 %v655, 7
        %v657 = vsub.s32 %v654, %v656
        %v658 = vrot.slane %v644, %v657
        %v659 = vcombine.high %v651, %v651
        %v660 = vcombine.high %v658, %v658
        %v662 = vunpack.c.l.s4 1966171168
        %v663 = vunpack.c.0.s8 %v662
        %v664 = vlaneseq
        %v665 = vshrl.u32 %v664, 7
        %v666 = vsub.s32 %v663, %v665
        %v667 = vrot.slane %v651, %v666
        %v669 = vunpack.c.l.s4 1966171168
        %v670 = vunpack.c.0.s8 %v669
        %v671 = vlaneseq
        %v672 = vshrl.u32 %v671, 7
        %v673 = vsub.s32 %v670, %v672
        %v674 = vrot.slane %v658, %v673
        %v676 = vunpack.c.l.s4 1966171168
        %v677 = vunpack.c.0.s8 %v676
        %v678 = vlaneseq
        %v679 = vshrl.u32 %v678, 7
        %v680 = vsub.s32 %v677, %v679
        %v681 = vrot.slane %v659, %v680
        %v683 = vunpack.c.l.s4 1966171168
        %v684 = vunpack.c.0.s8 %v683
        %v685 = vlaneseq
        %v686 = vshrl.u32 %v685, 7
        %v687 = vsub.s32 %v684, %v686
        %v688 = vrot.slane %v660, %v687
        %v689 = vcombine.high %v667, %v667
        %v690 = vcombine.high %v674, %v674
        %v691 = vcombine.high %v681, %v681
        %v692 = vcombine.high %v688, %v688
        %v693 = vcombine.high %v212, %v212
        %v695 = vunpack.c.l.s4 1966171168
        %v696 = vunpack.c.0.s8 %v695
        %v697 = vlaneseq
        %v698 = vshrl.u32 %v697, 7
        %v699 = vsub.s32 %v696, %v698
        %v700 = vrot.slane %v212, %v699
        %v702 = vunpack.c.l.s4 1966171168
        %v703 = vunpack.c.0.s8 %v702
        %v704 = vlaneseq
        %v705 = vshrl.u32 %v704, 7
        %v706 = vsub.s32 %v703, %v705
        %v707 = vrot.slane %v693, %v706
        %v708 = vcombine.high %v700, %v700
        %v709 = vcombine.high %v707, %v707
        %v711 = vunpack.c.l.s4 1966171168
        %v712 = vunpack.c.0.s8 %v711
        %v713 = vlaneseq
        %v714 = vshrl.u32 %v713, 7
        %v715 = vsub.s32 %v712, %v714
        %v716 = vrot.slane %v700, %v715
        %v718 = vunpack.c.l.s4 1966171168
        %v719 = vunpack.c.0.s8 %v718
        %v720 = vlaneseq
        %v721 = vshrl.u32 %v720, 7
        %v722 = vsub.s32 %v719, %v721
        %v723 = vrot.slane %v707, %v722
        %v725 = vunpack.c.l.s4 1966171168
        %v726 = vunpack.c.0.s8 %v725
        %v727 = vlaneseq
        %v728 = vshrl.u32 %v727, 7
        %v729 = vsub.s32 %v726, %v728
        %v730 = vrot.slane %v708, %v729
        %v732 = vunpack.c.l.s4 1966171168
        %v733 = vunpack.c.0.s8 %v732
        %v734 = vlaneseq
        %v735 = vshrl.u32 %v734, 7
        %v736 = vsub.s32 %v733, %v735
        %v737 = vrot.slane %v709, %v736
        %v738 = vcombine.high %v716, %v716
        %v739 = vcombine.high %v723, %v723
        %v740 = vcombine.high %v730, %v730
        %v741 = vcombine.high %v737, %v737
        %v742 = vlaneseq
        %v743 = vshrl.u32 %v742, 7
        %v744 = vsub.s32 0, %v743
        %v745 = vrot.slane %v667, %v744
        %v746 = vlaneseq
        %v747 = vshrl.u32 %v746, 7
        %v748 = vsub.s32 0, %v747
        %v749 = vrot.slane %v681, %v748
        %v750 = vlaneseq
        %v751 = vshrl.u32 %v750, 7
        %v752 = vsub.s32 0, %v751
        %v753 = vrot.slane %v689, %v752
        %v754 = vlaneseq
        %v755 = vshrl.u32 %v754, 7
        %v756 = vsub.s32 0, %v755
        %v757 = vrot.slane %v691, %v756
        %v758 = vlaneseq
        %v759 = vshrl.u32 %v758, 7
        %v760 = vsub.s32 0, %v759
        %v761 = vrot.slane %v674, %v760
        %v762 = vlaneseq
        %v763 = vshrl.u32 %v762, 7
        %v764 = vsub.s32 0, %v763
        %v765 = vrot.slane %v688, %v764
        %v766 = vlaneseq
        %v767 = vshrl.u32 %v766, 7
        %v768 = vsub.s32 0, %v767
        %v769 = vrot.slane %v690, %v768
        %v770 = vlaneseq
        %v771 = vshrl.u32 %v770, 7
        %v772 = vsub.s32 0, %v771
        %v773 = vrot.slane %v692, %v772
        %v774 = vlaneseq
        %v775 = vshrl.u32 %v774, 7
        %v776 = vsub.s32 0, %v775
        %v777 = vrot.slane %v716, %v776
        %v778 = vlaneseq
        %v779 = vshrl.u32 %v778, 7
        %v780 = vsub.s32 0, %v779
        %v781 = vrot.slane %v730, %v780
        %v782 = vlaneseq
        %v783 = vshrl.u32 %v782, 7
        %v784 = vsub.s32 0, %v783
        %v785 = vrot.slane %v738, %v784
        %v786 = vlaneseq
        %v787 = vshrl.u32 %v786, 7
        %v788 = vsub.s32 0, %v787
        %v789 = vrot.slane %v740, %v788
        %v790 = vlaneseq
        %v791 = vshrl.u32 %v790, 7
        %v792 = vsub.s32 0, %v791
        %v793 = vrot.slane %v723, %v792
        %v794 = vlaneseq
        %v795 = vshrl.u32 %v794, 7
        %v796 = vsub.s32 0, %v795
        %v797 = vrot.slane %v737, %v796
        %v798 = vlaneseq
        %v799 = vshrl.u32 %v798, 7
        %v800 = vsub.s32 0, %v799
        %v801 = vrot.slane %v739, %v800
        %v802 = vlaneseq
        %v803 = vshrl.u32 %v802, 7
        %v804 = vsub.s32 0, %v803
        %v805 = vrot.slane %v741, %v804
        %v822 = vsel %vm509, %v551, %v745
        %v823 = vsel %vm509, %v565, %v749
        %v824 = vsel %vm509, %v573, %v753
        %v825 = vsel %vm509, %v575, %v757
        %v826 = vsel %vm509, %v558, %v761
        %v827 = vsel %vm509, %v572, %v765
        %v828 = vsel %vm509, %v574, %v769
        %v829 = vsel %vm509, %v576, %v773
        %v830 = vsel %vm509, %v600, %v777
        %v831 = vsel %vm509, %v614, %v781
        %v832 = vsel %vm509, %v622, %v785
        %v833 = vsel %vm509, %v624, %v789
        %v834 = vsel %vm509, %v607, %v793
        %v835 = vsel %vm509, %v621, %v797
        %v836 = vsel %vm509, %v623, %v801
        %v837 = vsel %vm509, %v625, %v805
        %v838 = vlaneseq
        %v839 = vshrl.u32 %v838, 7
        %v840 = vsub.s32 0, %v839
        %v841 = vrot.slane %v510, %v840
        %843 = vbcast.lane.b32.xlu0 %v841, 256
        %v844 = vpop.permute.xlu0 %843
        %s846 = sor.u32 256, 8
        %847 = vbcast.lane.b32.xlu0 %v841, %s846
        %v848 = vpop.permute.xlu0 %847
        %v849 = vlaneseq
        %v850 = vshrl.u32 %v849, 7
        %v851 = vsub.s32 1, %v850
        %v852 = vrot.slane %v510, %v851
        %854 = vbcast.lane.b32.xlu0 %v852, 256
        %v855 = vpop.permute.xlu0 %854
        %s857 = sor.u32 256, 8
        %858 = vbcast.lane.b32.xlu0 %v852, %s857
        %v859 = vpop.permute.xlu0 %858
        %v860 = vlaneseq
        %v861 = vshrl.u32 %v860, 7
        %v862 = vsub.s32 0, %v861
        %v863 = vrot.slane %v511, %v862
        %865 = vbcast.lane.b32.xlu0 %v863, 256
        %v866 = vpop.permute.xlu0 %865
        %s868 = sor.u32 256, 8
        %869 = vbcast.lane.b32.xlu0 %v863, %s868
        %v870 = vpop.permute.xlu0 %869
        %v871 = vlaneseq
        %v872 = vshrl.u32 %v871, 7
        %v873 = vsub.s32 1, %v872
        %v874 = vrot.slane %v511, %v873
        %876 = vbcast.lane.b32.xlu0 %v874, 256
        %v877 = vpop.permute.xlu0 %876
        %s879 = sor.u32 256, 8
        %880 = vbcast.lane.b32.xlu0 %v874, %s879
        %v881 = vpop.permute.xlu0 %880
        %v882 = vlaneseq
        %v883 = vshrl.u32 %v882, 7
        %v884 = vsub.s32 0, %v883
        %v885 = vrot.slane %v512, %v884
        %887 = vbcast.lane.b32.xlu0 %v885, 256
        %v888 = vpop.permute.xlu0 %887
        %s890 = sor.u32 256, 8
        %891 = vbcast.lane.b32.xlu0 %v885, %s890
        %v892 = vpop.permute.xlu0 %891
        %v893 = vlaneseq
        %v894 = vshrl.u32 %v893, 7
        %v895 = vsub.s32 1, %v894
        %v896 = vrot.slane %v512, %v895
        %898 = vbcast.lane.b32.xlu0 %v896, 256
        %v899 = vpop.permute.xlu0 %898
        %s901 = sor.u32 256, 8
        %902 = vbcast.lane.b32.xlu0 %v896, %s901
        %v903 = vpop.permute.xlu0 %902
        %v904 = vlaneseq
        %v905 = vshrl.u32 %v904, 7
        %v906 = vsub.s32 0, %v905
        %v907 = vrot.slane %v513, %v906
        %909 = vbcast.lane.b32.xlu0 %v907, 256
        %v910 = vpop.permute.xlu0 %909
        %s912 = sor.u32 256, 8
        %913 = vbcast.lane.b32.xlu0 %v907, %s912
        %v914 = vpop.permute.xlu0 %913
        %v915 = vlaneseq
        %v916 = vshrl.u32 %v915, 7
        %v917 = vsub.s32 1, %v916
        %v918 = vrot.slane %v513, %v917
        %920 = vbcast.lane.b32.xlu0 %v918, 256
        %v921 = vpop.permute.xlu0 %920
        %s923 = sor.u32 256, 8
        %924 = vbcast.lane.b32.xlu0 %v918, %s923
        %v925 = vpop.permute.xlu0 %924
        %v926 = vlaneseq
        %v927 = vshrl.u32 %v926, 7
        %v928 = vsub.s32 0, %v927
        %v929 = vrot.slane %v514, %v928
        %931 = vbcast.lane.b32.xlu0 %v929, 256
        %v932 = vpop.permute.xlu0 %931
        %s934 = sor.u32 256, 8
        %935 = vbcast.lane.b32.xlu0 %v929, %s934
        %v936 = vpop.permute.xlu0 %935
        %v937 = vlaneseq
        %v938 = vshrl.u32 %v937, 7
        %v939 = vsub.s32 1, %v938
        %v940 = vrot.slane %v514, %v939
        %942 = vbcast.lane.b32.xlu0 %v940, 256
        %v943 = vpop.permute.xlu0 %942
        %s945 = sor.u32 256, 8
        %946 = vbcast.lane.b32.xlu0 %v940, %s945
        %v947 = vpop.permute.xlu0 %946
        %v948 = vlaneseq
        %v949 = vshrl.u32 %v948, 7
        %v950 = vsub.s32 0, %v949
        %v951 = vrot.slane %v515, %v950
        %953 = vbcast.lane.b32.xlu0 %v951, 256
        %v954 = vpop.permute.xlu0 %953
        %s956 = sor.u32 256, 8
        %957 = vbcast.lane.b32.xlu0 %v951, %s956
        %v958 = vpop.permute.xlu0 %957
        %v959 = vlaneseq
        %v960 = vshrl.u32 %v959, 7
        %v961 = vsub.s32 1, %v960
        %v962 = vrot.slane %v515, %v961
        %964 = vbcast.lane.b32.xlu0 %v962, 256
        %v965 = vpop.permute.xlu0 %964
        %s967 = sor.u32 256, 8
        %968 = vbcast.lane.b32.xlu0 %v962, %s967
        %v969 = vpop.permute.xlu0 %968
        %v970 = vlaneseq
        %v971 = vshrl.u32 %v970, 7
        %v972 = vsub.s32 0, %v971
        %v973 = vrot.slane %v516, %v972
        %975 = vbcast.lane.b32.xlu0 %v973, 256
        %v976 = vpop.permute.xlu0 %975
        %s978 = sor.u32 256, 8
        %979 = vbcast.lane.b32.xlu0 %v973, %s978
        %v980 = vpop.permute.xlu0 %979
        %v981 = vlaneseq
        %v982 = vshrl.u32 %v981, 7
        %v983 = vsub.s32 1, %v982
        %v984 = vrot.slane %v516, %v983
        %986 = vbcast.lane.b32.xlu0 %v984, 256
        %v987 = vpop.permute.xlu0 %986
        %s989 = sor.u32 256, 8
        %990 = vbcast.lane.b32.xlu0 %v984, %s989
        %v991 = vpop.permute.xlu0 %990
        %v992 = vlaneseq
        %v993 = vshrl.u32 %v992, 7
        %v994 = vsub.s32 0, %v993
        %v995 = vrot.slane %v517, %v994
        %997 = vbcast.lane.b32.xlu0 %v995, 256
        %v998 = vpop.permute.xlu0 %997
        %s1000 = sor.u32 256, 8
        %1001 = vbcast.lane.b32.xlu0 %v995, %s1000
        %v1002 = vpop.permute.xlu0 %1001
        %v1003 = vlaneseq
        %v1004 = vshrl.u32 %v1003, 7
        %v1005 = vsub.s32 1, %v1004
        %v1006 = vrot.slane %v517, %v1005
        %1008 = vbcast.lane.b32.xlu0 %v1006, 256
        %v1009 = vpop.permute.xlu0 %1008
        %s1011 = sor.u32 256, 8
        %1012 = vbcast.lane.b32.xlu0 %v1006, %s1011
        %v1013 = vpop.permute.xlu0 %1012
        %v1014 = vlaneseq
        %v1015 = vshrl.u32 %v1014, 7
        %v1016 = vsub.s32 0, %v1015
        %v1017 = vrot.slane %v518, %v1016
        %1019 = vbcast.lane.b32.xlu0 %v1017, 256
        %v1020 = vpop.permute.xlu0 %1019
        %s1022 = sor.u32 256, 8
        %1023 = vbcast.lane.b32.xlu0 %v1017, %s1022
        %v1024 = vpop.permute.xlu0 %1023
        %v1025 = vlaneseq
        %v1026 = vshrl.u32 %v1025, 7
        %v1027 = vsub.s32 1, %v1026
        %v1028 = vrot.slane %v518, %v1027
        %1030 = vbcast.lane.b32.xlu0 %v1028, 256
        %v1031 = vpop.permute.xlu0 %1030
        %s1033 = sor.u32 256, 8
        %1034 = vbcast.lane.b32.xlu0 %v1028, %s1033
        %v1035 = vpop.permute.xlu0 %1034
        %v1036 = vlaneseq
        %v1037 = vshrl.u32 %v1036, 7
        %v1038 = vsub.s32 0, %v1037
        %v1039 = vrot.slane %v519, %v1038
        %1041 = vbcast.lane.b32.xlu0 %v1039, 256
        %v1042 = vpop.permute.xlu0 %1041
        %s1044 = sor.u32 256, 8
        %1045 = vbcast.lane.b32.xlu0 %v1039, %s1044
        %v1046 = vpop.permute.xlu0 %1045
        %v1047 = vlaneseq
        %v1048 = vshrl.u32 %v1047, 7
        %v1049 = vsub.s32 1, %v1048
        %v1050 = vrot.slane %v519, %v1049
        %1052 = vbcast.lane.b32.xlu0 %v1050, 256
        %v1053 = vpop.permute.xlu0 %1052
        %s1055 = sor.u32 256, 8
        %1056 = vbcast.lane.b32.xlu0 %v1050, %s1055
        %v1057 = vpop.permute.xlu0 %1056
        %v1058 = vlaneseq
        %v1059 = vshrl.u32 %v1058, 7
        %v1060 = vsub.s32 0, %v1059
        %v1061 = vrot.slane %v520, %v1060
        %1063 = vbcast.lane.b32.xlu0 %v1061, 256
        %v1064 = vpop.permute.xlu0 %1063
        %s1066 = sor.u32 256, 8
        %1067 = vbcast.lane.b32.xlu0 %v1061, %s1066
        %v1068 = vpop.permute.xlu0 %1067
        %v1069 = vlaneseq
        %v1070 = vshrl.u32 %v1069, 7
        %v1071 = vsub.s32 1, %v1070
        %v1072 = vrot.slane %v520, %v1071
        %1074 = vbcast.lane.b32.xlu0 %v1072, 256
        %v1075 = vpop.permute.xlu0 %1074
        %s1077 = sor.u32 256, 8
        %1078 = vbcast.lane.b32.xlu0 %v1072, %s1077
        %v1079 = vpop.permute.xlu0 %1078
        %v1080 = vlaneseq
        %v1081 = vshrl.u32 %v1080, 7
        %v1082 = vsub.s32 0, %v1081
        %v1083 = vrot.slane %v521, %v1082
        %1085 = vbcast.lane.b32.xlu0 %v1083, 256
        %v1086 = vpop.permute.xlu0 %1085
        %s1088 = sor.u32 256, 8
        %1089 = vbcast.lane.b32.xlu0 %v1083, %s1088
        %v1090 = vpop.permute.xlu0 %1089
        %v1091 = vlaneseq
        %v1092 = vshrl.u32 %v1091, 7
        %v1093 = vsub.s32 1, %v1092
        %v1094 = vrot.slane %v521, %v1093
        %1096 = vbcast.lane.b32.xlu0 %v1094, 256
        %v1097 = vpop.permute.xlu0 %1096
        %s1099 = sor.u32 256, 8
        %1100 = vbcast.lane.b32.xlu0 %v1094, %s1099
        %v1101 = vpop.permute.xlu0 %1100
        %v1102 = vlaneseq
        %v1103 = vshrl.u32 %v1102, 7
        %v1104 = vsub.s32 0, %v1103
        %v1105 = vrot.slane %v522, %v1104
        %1107 = vbcast.lane.b32.xlu0 %v1105, 256
        %v1108 = vpop.permute.xlu0 %1107
        %s1110 = sor.u32 256, 8
        %1111 = vbcast.lane.b32.xlu0 %v1105, %s1110
        %v1112 = vpop.permute.xlu0 %1111
        %v1113 = vlaneseq
        %v1114 = vshrl.u32 %v1113, 7
        %v1115 = vsub.s32 1, %v1114
        %v1116 = vrot.slane %v522, %v1115
        %1118 = vbcast.lane.b32.xlu0 %v1116, 256
        %v1119 = vpop.permute.xlu0 %1118
        %s1121 = sor.u32 256, 8
        %1122 = vbcast.lane.b32.xlu0 %v1116, %s1121
        %v1123 = vpop.permute.xlu0 %1122
        %v1124 = vlaneseq
        %v1125 = vshrl.u32 %v1124, 7
        %v1126 = vsub.s32 0, %v1125
        %v1127 = vrot.slane %v523, %v1126
        %1129 = vbcast.lane.b32.xlu0 %v1127, 256
        %v1130 = vpop.permute.xlu0 %1129
        %s1132 = sor.u32 256, 8
        %1133 = vbcast.lane.b32.xlu0 %v1127, %s1132
        %v1134 = vpop.permute.xlu0 %1133
        %v1135 = vlaneseq
        %v1136 = vshrl.u32 %v1135, 7
        %v1137 = vsub.s32 1, %v1136
        %v1138 = vrot.slane %v523, %v1137
        %1140 = vbcast.lane.b32.xlu0 %v1138, 256
        %v1141 = vpop.permute.xlu0 %1140
        %s1143 = sor.u32 256, 8
        %1144 = vbcast.lane.b32.xlu0 %v1138, %s1143
        %v1145 = vpop.permute.xlu0 %1144
        %v1146 = vlaneseq
        %v1147 = vshrl.u32 %v1146, 7
        %v1148 = vsub.s32 0, %v1147
        %v1149 = vrot.slane %v524, %v1148
        %1151 = vbcast.lane.b32.xlu0 %v1149, 256
        %v1152 = vpop.permute.xlu0 %1151
        %s1154 = sor.u32 256, 8
        %1155 = vbcast.lane.b32.xlu0 %v1149, %s1154
        %v1156 = vpop.permute.xlu0 %1155
        %v1157 = vlaneseq
        %v1158 = vshrl.u32 %v1157, 7
        %v1159 = vsub.s32 1, %v1158
        %v1160 = vrot.slane %v524, %v1159
        %1162 = vbcast.lane.b32.xlu0 %v1160, 256
        %v1163 = vpop.permute.xlu0 %1162
        %s1165 = sor.u32 256, 8
        %1166 = vbcast.lane.b32.xlu0 %v1160, %s1165
        %v1167 = vpop.permute.xlu0 %1166
        %v1168 = vlaneseq
        %v1169 = vshrl.u32 %v1168, 7
        %v1170 = vsub.s32 0, %v1169
        %v1171 = vrot.slane %v525, %v1170
        %1173 = vbcast.lane.b32.xlu0 %v1171, 256
        %v1174 = vpop.permute.xlu0 %1173
        %s1176 = sor.u32 256, 8
        %1177 = vbcast.lane.b32.xlu0 %v1171, %s1176
        %v1178 = vpop.permute.xlu0 %1177
        %v1179 = vlaneseq
        %v1180 = vshrl.u32 %v1179, 7
        %v1181 = vsub.s32 1, %v1180
        %v1182 = vrot.slane %v525, %v1181
        %1184 = vbcast.lane.b32.xlu0 %v1182, 256
        %v1185 = vpop.permute.xlu0 %1184
        %s1187 = sor.u32 256, 8
        %1188 = vbcast.lane.b32.xlu0 %v1182, %s1187
        %v1189 = vpop.permute.xlu0 %1188
        %v1190 = vlaneseq
        %v1191 = vshrl.u32 %v1190, 7
        %v1192 = vsub.s32 0, %v1191
        %v1193 = vrot.slane %v822, %v1192
        %1195 = vbcast.lane.b32.xlu0 %v1193, 256
        %v1196 = vpop.permute.xlu0 %1195
        %s1198 = sor.u32 256, 8
        %1199 = vbcast.lane.b32.xlu0 %v1193, %s1198
        %v1200 = vpop.permute.xlu0 %1199
        %v1201 = vlaneseq
        %v1202 = vshrl.u32 %v1201, 7
        %v1203 = vsub.s32 1, %v1202
        %v1204 = vrot.slane %v822, %v1203
        %1206 = vbcast.lane.b32.xlu0 %v1204, 256
        %v1207 = vpop.permute.xlu0 %1206
        %s1209 = sor.u32 256, 8
        %1210 = vbcast.lane.b32.xlu0 %v1204, %s1209
        %v1211 = vpop.permute.xlu0 %1210
        %v1212 = vlaneseq
        %v1213 = vshrl.u32 %v1212, 7
        %v1214 = vsub.s32 0, %v1213
        %v1215 = vrot.slane %v823, %v1214
        %1217 = vbcast.lane.b32.xlu0 %v1215, 256
        %v1218 = vpop.permute.xlu0 %1217
        %s1220 = sor.u32 256, 8
        %1221 = vbcast.lane.b32.xlu0 %v1215, %s1220
        %v1222 = vpop.permute.xlu0 %1221
        %v1223 = vlaneseq
        %v1224 = vshrl.u32 %v1223, 7
        %v1225 = vsub.s32 1, %v1224
        %v1226 = vrot.slane %v823, %v1225
        %1228 = vbcast.lane.b32.xlu0 %v1226, 256
        %v1229 = vpop.permute.xlu0 %1228
        %s1231 = sor.u32 256, 8
        %1232 = vbcast.lane.b32.xlu0 %v1226, %s1231
        %v1233 = vpop.permute.xlu0 %1232
        %v1234 = vlaneseq
        %v1235 = vshrl.u32 %v1234, 7
        %v1236 = vsub.s32 0, %v1235
        %v1237 = vrot.slane %v824, %v1236
        %1239 = vbcast.lane.b32.xlu0 %v1237, 256
        %v1240 = vpop.permute.xlu0 %1239
        %s1242 = sor.u32 256, 8
        %1243 = vbcast.lane.b32.xlu0 %v1237, %s1242
        %v1244 = vpop.permute.xlu0 %1243
        %v1245 = vlaneseq
        %v1246 = vshrl.u32 %v1245, 7
        %v1247 = vsub.s32 1, %v1246
        %v1248 = vrot.slane %v824, %v1247
        %1250 = vbcast.lane.b32.xlu0 %v1248, 256
        %v1251 = vpop.permute.xlu0 %1250
        %s1253 = sor.u32 256, 8
        %1254 = vbcast.lane.b32.xlu0 %v1248, %s1253
        %v1255 = vpop.permute.xlu0 %1254
        %v1256 = vlaneseq
        %v1257 = vshrl.u32 %v1256, 7
        %v1258 = vsub.s32 0, %v1257
        %v1259 = vrot.slane %v825, %v1258
        %1261 = vbcast.lane.b32.xlu0 %v1259, 256
        %v1262 = vpop.permute.xlu0 %1261
        %s1264 = sor.u32 256, 8
        %1265 = vbcast.lane.b32.xlu0 %v1259, %s1264
        %v1266 = vpop.permute.xlu0 %1265
        %v1267 = vlaneseq
        %v1268 = vshrl.u32 %v1267, 7
        %v1269 = vsub.s32 1, %v1268
        %v1270 = vrot.slane %v825, %v1269
        %1272 = vbcast.lane.b32.xlu0 %v1270, 256
        %v1273 = vpop.permute.xlu0 %1272
        %s1275 = sor.u32 256, 8
        %1276 = vbcast.lane.b32.xlu0 %v1270, %s1275
        %v1277 = vpop.permute.xlu0 %1276
        %v1278 = vlaneseq
        %v1279 = vshrl.u32 %v1278, 7
        %v1280 = vsub.s32 0, %v1279
        %v1281 = vrot.slane %v826, %v1280
        %1283 = vbcast.lane.b32.xlu0 %v1281, 256
        %v1284 = vpop.permute.xlu0 %1283
        %s1286 = sor.u32 256, 8
        %1287 = vbcast.lane.b32.xlu0 %v1281, %s1286
        %v1288 = vpop.permute.xlu0 %1287
        %v1289 = vlaneseq
        %v1290 = vshrl.u32 %v1289, 7
        %v1291 = vsub.s32 1, %v1290
        %v1292 = vrot.slane %v826, %v1291
        %1294 = vbcast.lane.b32.xlu0 %v1292, 256
        %v1295 = vpop.permute.xlu0 %1294
        %s1297 = sor.u32 256, 8
        %1298 = vbcast.lane.b32.xlu0 %v1292, %s1297
        %v1299 = vpop.permute.xlu0 %1298
        %v1300 = vlaneseq
        %v1301 = vshrl.u32 %v1300, 7
        %v1302 = vsub.s32 0, %v1301
        %v1303 = vrot.slane %v827, %v1302
        %1305 = vbcast.lane.b32.xlu0 %v1303, 256
        %v1306 = vpop.permute.xlu0 %1305
        %s1308 = sor.u32 256, 8
        %1309 = vbcast.lane.b32.xlu0 %v1303, %s1308
        %v1310 = vpop.permute.xlu0 %1309
        %v1311 = vlaneseq
        %v1312 = vshrl.u32 %v1311, 7
        %v1313 = vsub.s32 1, %v1312
        %v1314 = vrot.slane %v827, %v1313
        %1316 = vbcast.lane.b32.xlu0 %v1314, 256
        %v1317 = vpop.permute.xlu0 %1316
        %s1319 = sor.u32 256, 8
        %1320 = vbcast.lane.b32.xlu0 %v1314, %s1319
        %v1321 = vpop.permute.xlu0 %1320
        %v1322 = vlaneseq
        %v1323 = vshrl.u32 %v1322, 7
        %v1324 = vsub.s32 0, %v1323
        %v1325 = vrot.slane %v828, %v1324
        %1327 = vbcast.lane.b32.xlu0 %v1325, 256
        %v1328 = vpop.permute.xlu0 %1327
        %s1330 = sor.u32 256, 8
        %1331 = vbcast.lane.b32.xlu0 %v1325, %s1330
        %v1332 = vpop.permute.xlu0 %1331
        %v1333 = vlaneseq
        %v1334 = vshrl.u32 %v1333, 7
        %v1335 = vsub.s32 1, %v1334
        %v1336 = vrot.slane %v828, %v1335
        %1338 = vbcast.lane.b32.xlu0 %v1336, 256
        %v1339 = vpop.permute.xlu0 %1338
        %s1341 = sor.u32 256, 8
        %1342 = vbcast.lane.b32.xlu0 %v1336, %s1341
        %v1343 = vpop.permute.xlu0 %1342
        %v1344 = vlaneseq
        %v1345 = vshrl.u32 %v1344, 7
        %v1346 = vsub.s32 0, %v1345
        %v1347 = vrot.slane %v829, %v1346
        %1349 = vbcast.lane.b32.xlu0 %v1347, 256
        %v1350 = vpop.permute.xlu0 %1349
        %s1352 = sor.u32 256, 8
        %1353 = vbcast.lane.b32.xlu0 %v1347, %s1352
        %v1354 = vpop.permute.xlu0 %1353
        %v1355 = vlaneseq
        %v1356 = vshrl.u32 %v1355, 7
        %v1357 = vsub.s32 1, %v1356
        %v1358 = vrot.slane %v829, %v1357
        %1360 = vbcast.lane.b32.xlu0 %v1358, 256
        %v1361 = vpop.permute.xlu0 %1360
        %s1363 = sor.u32 256, 8
        %1364 = vbcast.lane.b32.xlu0 %v1358, %s1363
        %v1365 = vpop.permute.xlu0 %1364
        %v1366 = vlaneseq
        %v1367 = vshrl.u32 %v1366, 7
        %v1368 = vsub.s32 0, %v1367
        %v1369 = vrot.slane %v830, %v1368
        %1371 = vbcast.lane.b32.xlu0 %v1369, 256
        %v1372 = vpop.permute.xlu0 %1371
        %s1374 = sor.u32 256, 8
        %1375 = vbcast.lane.b32.xlu0 %v1369, %s1374
        %v1376 = vpop.permute.xlu0 %1375
        %v1377 = vlaneseq
        %v1378 = vshrl.u32 %v1377, 7
        %v1379 = vsub.s32 1, %v1378
        %v1380 = vrot.slane %v830, %v1379
        %1382 = vbcast.lane.b32.xlu0 %v1380, 256
        %v1383 = vpop.permute.xlu0 %1382
        %s1385 = sor.u32 256, 8
        %1386 = vbcast.lane.b32.xlu0 %v1380, %s1385
        %v1387 = vpop.permute.xlu0 %1386
        %v1388 = vlaneseq
        %v1389 = vshrl.u32 %v1388, 7
        %v1390 = vsub.s32 0, %v1389
        %v1391 = vrot.slane %v831, %v1390
        %1393 = vbcast.lane.b32.xlu0 %v1391, 256
        %v1394 = vpop.permute.xlu0 %1393
        %s1396 = sor.u32 256, 8
        %1397 = vbcast.lane.b32.xlu0 %v1391, %s1396
        %v1398 = vpop.permute.xlu0 %1397
        %v1399 = vlaneseq
        %v1400 = vshrl.u32 %v1399, 7
        %v1401 = vsub.s32 1, %v1400
        %v1402 = vrot.slane %v831, %v1401
        %1404 = vbcast.lane.b32.xlu0 %v1402, 256
        %v1405 = vpop.permute.xlu0 %1404
        %s1407 = sor.u32 256, 8
        %1408 = vbcast.lane.b32.xlu0 %v1402, %s1407
        %v1409 = vpop.permute.xlu0 %1408
        %v1410 = vlaneseq
        %v1411 = vshrl.u32 %v1410, 7
        %v1412 = vsub.s32 0, %v1411
        %v1413 = vrot.slane %v832, %v1412
        %1415 = vbcast.lane.b32.xlu0 %v1413, 256
        %v1416 = vpop.permute.xlu0 %1415
        %s1418 = sor.u32 256, 8
        %1419 = vbcast.lane.b32.xlu0 %v1413, %s1418
        %v1420 = vpop.permute.xlu0 %1419
        %v1421 = vlaneseq
        %v1422 = vshrl.u32 %v1421, 7
        %v1423 = vsub.s32 1, %v1422
        %v1424 = vrot.slane %v832, %v1423
        %1426 = vbcast.lane.b32.xlu0 %v1424, 256
        %v1427 = vpop.permute.xlu0 %1426
        %s1429 = sor.u32 256, 8
        %1430 = vbcast.lane.b32.xlu0 %v1424, %s1429
        %v1431 = vpop.permute.xlu0 %1430
        %v1432 = vlaneseq
        %v1433 = vshrl.u32 %v1432, 7
        %v1434 = vsub.s32 0, %v1433
        %v1435 = vrot.slane %v833, %v1434
        %1437 = vbcast.lane.b32.xlu0 %v1435, 256
        %v1438 = vpop.permute.xlu0 %1437
        %s1440 = sor.u32 256, 8
        %1441 = vbcast.lane.b32.xlu0 %v1435, %s1440
        %v1442 = vpop.permute.xlu0 %1441
        %v1443 = vlaneseq
        %v1444 = vshrl.u32 %v1443, 7
        %v1445 = vsub.s32 1, %v1444
        %v1446 = vrot.slane %v833, %v1445
        %1448 = vbcast.lane.b32.xlu0 %v1446, 256
        %v1449 = vpop.permute.xlu0 %1448
        %s1451 = sor.u32 256, 8
        %1452 = vbcast.lane.b32.xlu0 %v1446, %s1451
        %v1453 = vpop.permute.xlu0 %1452
        %v1454 = vlaneseq
        %v1455 = vshrl.u32 %v1454, 7
        %v1456 = vsub.s32 0, %v1455
        %v1457 = vrot.slane %v834, %v1456
        %1459 = vbcast.lane.b32.xlu0 %v1457, 256
        %v1460 = vpop.permute.xlu0 %1459
        %s1462 = sor.u32 256, 8
        %1463 = vbcast.lane.b32.xlu0 %v1457, %s1462
        %v1464 = vpop.permute.xlu0 %1463
        %v1465 = vlaneseq
        %v1466 = vshrl.u32 %v1465, 7
        %v1467 = vsub.s32 1, %v1466
        %v1468 = vrot.slane %v834, %v1467
        %1470 = vbcast.lane.b32.xlu0 %v1468, 256
        %v1471 = vpop.permute.xlu0 %1470
        %s1473 = sor.u32 256, 8
        %1474 = vbcast.lane.b32.xlu0 %v1468, %s1473
        %v1475 = vpop.permute.xlu0 %1474
        %v1476 = vlaneseq
        %v1477 = vshrl.u32 %v1476, 7
        %v1478 = vsub.s32 0, %v1477
        %v1479 = vrot.slane %v835, %v1478
        %1481 = vbcast.lane.b32.xlu0 %v1479, 256
        %v1482 = vpop.permute.xlu0 %1481
        %s1484 = sor.u32 256, 8
        %1485 = vbcast.lane.b32.xlu0 %v1479, %s1484
        %v1486 = vpop.permute.xlu0 %1485
        %v1487 = vlaneseq
        %v1488 = vshrl.u32 %v1487, 7
        %v1489 = vsub.s32 1, %v1488
        %v1490 = vrot.slane %v835, %v1489
        %1492 = vbcast.lane.b32.xlu0 %v1490, 256
        %v1493 = vpop.permute.xlu0 %1492
        %s1495 = sor.u32 256, 8
        %1496 = vbcast.lane.b32.xlu0 %v1490, %s1495
        %v1497 = vpop.permute.xlu0 %1496
        %v1498 = vlaneseq
        %v1499 = vshrl.u32 %v1498, 7
        %v1500 = vsub.s32 0, %v1499
        %v1501 = vrot.slane %v836, %v1500
        %1503 = vbcast.lane.b32.xlu0 %v1501, 256
        %v1504 = vpop.permute.xlu0 %1503
        %s1506 = sor.u32 256, 8
        %1507 = vbcast.lane.b32.xlu0 %v1501, %s1506
        %v1508 = vpop.permute.xlu0 %1507
        %v1509 = vlaneseq
        %v1510 = vshrl.u32 %v1509, 7
        %v1511 = vsub.s32 1, %v1510
        %v1512 = vrot.slane %v836, %v1511
        %1514 = vbcast.lane.b32.xlu0 %v1512, 256
        %v1515 = vpop.permute.xlu0 %1514
        %s1517 = sor.u32 256, 8
        %1518 = vbcast.lane.b32.xlu0 %v1512, %s1517
        %v1519 = vpop.permute.xlu0 %1518
        %v1520 = vlaneseq
        %v1521 = vshrl.u32 %v1520, 7
        %v1522 = vsub.s32 0, %v1521
        %v1523 = vrot.slane %v837, %v1522
        %1525 = vbcast.lane.b32.xlu0 %v1523, 256
        %v1526 = vpop.permute.xlu0 %1525
        %s1528 = sor.u32 256, 8
        %1529 = vbcast.lane.b32.xlu0 %v1523, %s1528
        %v1530 = vpop.permute.xlu0 %1529
        %v1531 = vlaneseq
        %v1532 = vshrl.u32 %v1531, 7
        %v1533 = vsub.s32 1, %v1532
        %v1534 = vrot.slane %v837, %v1533
        %1536 = vbcast.lane.b32.xlu0 %v1534, 256
        %v1537 = vpop.permute.xlu0 %1536
        %s1539 = sor.u32 256, 8
        %1540 = vbcast.lane.b32.xlu0 %v1534, %s1539
        %v1541 = vpop.permute.xlu0 %1540
        %vm1542 = vcmask 7168
        %v1543 = vsel %vm1542, %v844, %v1196
        %v1544 = vsel %vm1542, %v848, %v1200
        %v1545 = vsel %vm1542, %v855, %v1207
        %v1546 = vsel %vm1542, %v859, %v1211
        %v1547 = vsel %vm1542, %v866, %v1218
        %v1548 = vsel %vm1542, %v870, %v1222
        %v1549 = vsel %vm1542, %v877, %v1229
        %v1550 = vsel %vm1542, %v881, %v1233
        %v1551 = vsel %vm1542, %v888, %v1240
        %v1552 = vsel %vm1542, %v892, %v1244
        %v1553 = vsel %vm1542, %v899, %v1251
        %v1554 = vsel %vm1542, %v903, %v1255
        %v1555 = vsel %vm1542, %v910, %v1262
        %v1556 = vsel %vm1542, %v914, %v1266
        %v1557 = vsel %vm1542, %v921, %v1273
        %v1558 = vsel %vm1542, %v925, %v1277
        %v1559 = vsel %vm1542, %v932, %v1284
        %v1560 = vsel %vm1542, %v936, %v1288
        %v1561 = vsel %vm1542, %v943, %v1295
        %v1562 = vsel %vm1542, %v947, %v1299
        %v1563 = vsel %vm1542, %v954, %v1306
        %v1564 = vsel %vm1542, %v958, %v1310
        %v1565 = vsel %vm1542, %v965, %v1317
        %v1566 = vsel %vm1542, %v969, %v1321
        %v1567 = vsel %vm1542, %v976, %v1328
        %v1568 = vsel %vm1542, %v980, %v1332
        %v1569 = vsel %vm1542, %v987, %v1339
        %v1570 = vsel %vm1542, %v991, %v1343
        %v1571 = vsel %vm1542, %v998, %v1350
        %v1572 = vsel %vm1542, %v1002, %v1354
        %v1573 = vsel %vm1542, %v1009, %v1361
        %v1574 = vsel %vm1542, %v1013, %v1365
        %v1575 = vsel %vm1542, %v1020, %v1372
        %v1576 = vsel %vm1542, %v1024, %v1376
        %v1577 = vsel %vm1542, %v1031, %v1383
        %v1578 = vsel %vm1542, %v1035, %v1387
        %v1579 = vsel %vm1542, %v1042, %v1394
        %v1580 = vsel %vm1542, %v1046, %v1398
        %v1581 = vsel %vm1542, %v1053, %v1405
        %v1582 = vsel %vm1542, %v1057, %v1409
        %v1583 = vsel %vm1542, %v1064, %v1416
        %v1584 = vsel %vm1542, %v1068, %v1420
        %v1585 = vsel %vm1542, %v1075, %v1427
        %v1586 = vsel %vm1542, %v1079, %v1431
        %v1587 = vsel %vm1542, %v1086, %v1438
        %v1588 = vsel %vm1542, %v1090, %v1442
        %v1589 = vsel %vm1542, %v1097, %v1449
        %v1590 = vsel %vm1542, %v1101, %v1453
        %v1591 = vsel %vm1542, %v1108, %v1460
        %v1592 = vsel %vm1542, %v1112, %v1464
        %v1593 = vsel %vm1542, %v1119, %v1471
        %v1594 = vsel %vm1542, %v1123, %v1475
        %v1595 = vsel %vm1542, %v1130, %v1482
        %v1596 = vsel %vm1542, %v1134, %v1486
        %v1597 = vsel %vm1542, %v1141, %v1493
        %v1598 = vsel %vm1542, %v1145, %v1497
        %v1599 = vsel %vm1542, %v1152, %v1504
        %v1600 = vsel %vm1542, %v1156, %v1508
        %v1601 = vsel %vm1542, %v1163, %v1515
        %v1602 = vsel %vm1542, %v1167, %v1519
        %v1603 = vsel %vm1542, %v1174, %v1526
        %v1604 = vsel %vm1542, %v1178, %v1530
        %v1605 = vsel %vm1542, %v1185, %v1537
        %v1606 = vsel %vm1542, %v1189, %v1541
        %v1607 = vcombine.low %v1543, %v1547
        %v1608 = vcombine.high %v1543, %v1547
        %v1610 = vunpack.c.l.s4 1983009808
        %v1611 = vunpack.c.0.s8 %v1610
        %v1612 = vlaneseq
        %v1613 = vshrl.u32 %v1612, 7
        %v1614 = vsub.s32 %v1611, %v1613
        %v1615 = vrot.slane %v1607, %v1614
        %v1617 = vunpack.c.l.s4 1983009808
        %v1618 = vunpack.c.0.s8 %v1617
        %v1619 = vlaneseq
        %v1620 = vshrl.u32 %v1619, 7
        %v1621 = vsub.s32 %v1618, %v1620
        %v1622 = vrot.slane %v1608, %v1621
        %v1623 = vcombine.low %v1545, %v1549
        %v1624 = vcombine.high %v1545, %v1549
        %v1626 = vunpack.c.l.s4 1983009808
        %v1627 = vunpack.c.0.s8 %v1626
        %v1628 = vlaneseq
        %v1629 = vshrl.u32 %v1628, 7
        %v1630 = vsub.s32 %v1627, %v1629
        %v1631 = vrot.slane %v1623, %v1630
        %v1633 = vunpack.c.l.s4 1983009808
        %v1634 = vunpack.c.0.s8 %v1633
        %v1635 = vlaneseq
        %v1636 = vshrl.u32 %v1635, 7
        %v1637 = vsub.s32 %v1634, %v1636
        %v1638 = vrot.slane %v1624, %v1637
        %v1639 = vcombine.low %v1551, %v1555
        %v1640 = vcombine.high %v1551, %v1555
        %v1642 = vunpack.c.l.s4 1983009808
        %v1643 = vunpack.c.0.s8 %v1642
        %v1644 = vlaneseq
        %v1645 = vshrl.u32 %v1644, 7
        %v1646 = vsub.s32 %v1643, %v1645
        %v1647 = vrot.slane %v1639, %v1646
        %v1649 = vunpack.c.l.s4 1983009808
        %v1650 = vunpack.c.0.s8 %v1649
        %v1651 = vlaneseq
        %v1652 = vshrl.u32 %v1651, 7
        %v1653 = vsub.s32 %v1650, %v1652
        %v1654 = vrot.slane %v1640, %v1653
        %v1655 = vcombine.low %v1553, %v1557
        %v1656 = vcombine.high %v1553, %v1557
        %v1658 = vunpack.c.l.s4 1983009808
        %v1659 = vunpack.c.0.s8 %v1658
        %v1660 = vlaneseq
        %v1661 = vshrl.u32 %v1660, 7
        %v1662 = vsub.s32 %v1659, %v1661
        %v1663 = vrot.slane %v1655, %v1662
        %v1665 = vunpack.c.l.s4 1983009808
        %v1666 = vunpack.c.0.s8 %v1665
        %v1667 = vlaneseq
        %v1668 = vshrl.u32 %v1667, 7
        %v1669 = vsub.s32 %v1666, %v1668
        %v1670 = vrot.slane %v1656, %v1669
        %v1671 = vcombine.low %v1615, %v1631
        %v1672 = vcombine.high %v1615, %v1631
        %v1674 = vunpack.c.l.s4 1934713408
        %v1675 = vunpack.c.0.s8 %v1674
        %v1676 = vlaneseq
        %v1677 = vshrl.u32 %v1676, 7
        %v1678 = vsub.s32 %v1675, %v1677
        %v1679 = vrot.slane %v1671, %v1678
        %v1681 = vunpack.c.l.s4 1934713408
        %v1682 = vunpack.c.0.s8 %v1681
        %v1683 = vlaneseq
        %v1684 = vshrl.u32 %v1683, 7
        %v1685 = vsub.s32 %v1682, %v1684
        %v1686 = vrot.slane %v1672, %v1685
        %v1687 = vcombine.low %v1622, %v1638
        %v1688 = vcombine.high %v1622, %v1638
        %v1690 = vunpack.c.l.s4 1934713408
        %v1691 = vunpack.c.0.s8 %v1690
        %v1692 = vlaneseq
        %v1693 = vshrl.u32 %v1692, 7
        %v1694 = vsub.s32 %v1691, %v1693
        %v1695 = vrot.slane %v1687, %v1694
        %v1697 = vunpack.c.l.s4 1934713408
        %v1698 = vunpack.c.0.s8 %v1697
        %v1699 = vlaneseq
        %v1700 = vshrl.u32 %v1699, 7
        %v1701 = vsub.s32 %v1698, %v1700
        %v1702 = vrot.slane %v1688, %v1701
        %v1703 = vcombine.low %v1647, %v1663
        %v1704 = vcombine.high %v1647, %v1663
        %v1706 = vunpack.c.l.s4 1934713408
        %v1707 = vunpack.c.0.s8 %v1706
        %v1708 = vlaneseq
        %v1709 = vshrl.u32 %v1708, 7
        %v1710 = vsub.s32 %v1707, %v1709
        %v1711 = vrot.slane %v1703, %v1710
        %v1713 = vunpack.c.l.s4 1934713408
        %v1714 = vunpack.c.0.s8 %v1713
        %v1715 = vlaneseq
        %v1716 = vshrl.u32 %v1715, 7
        %v1717 = vsub.s32 %v1714, %v1716
        %v1718 = vrot.slane %v1704, %v1717
        %v1719 = vcombine.low %v1654, %v1670
        %v1720 = vcombine.high %v1654, %v1670
        %v1722 = vunpack.c.l.s4 1934713408
        %v1723 = vunpack.c.0.s8 %v1722
        %v1724 = vlaneseq
        %v1725 = vshrl.u32 %v1724, 7
        %v1726 = vsub.s32 %v1723, %v1725
        %v1727 = vrot.slane %v1719, %v1726
        %v1729 = vunpack.c.l.s4 1934713408
        %v1730 = vunpack.c.0.s8 %v1729
        %v1731 = vlaneseq
        %v1732 = vshrl.u32 %v1731, 7
        %v1733 = vsub.s32 %v1730, %v1732
        %v1734 = vrot.slane %v1720, %v1733
        %v1735 = vcombine.low %v1679, %v1711
        %v1736 = vcombine.high %v1679, %v1711
        %v1737 = vcombine.low %v1686, %v1718
        %v1738 = vcombine.high %v1686, %v1718
        %v1739 = vcombine.low %v1695, %v1727
        %v1740 = vcombine.high %v1695, %v1727
        %v1741 = vcombine.low %v1702, %v1734
        %v1742 = vcombine.high %v1702, %v1734
        %v1743 = vcombine.low %v1559, %v1563
        %v1744 = vcombine.high %v1559, %v1563
        %v1746 = vunpack.c.l.s4 1983009808
        %v1747 = vunpack.c.0.s8 %v1746
        %v1748 = vlaneseq
        %v1749 = vshrl.u32 %v1748, 7
        %v1750 = vsub.s32 %v1747, %v1749
        %v1751 = vrot.slane %v1743, %v1750
        %v1753 = vunpack.c.l.s4 1983009808
        %v1754 = vunpack.c.0.s8 %v1753
        %v1755 = vlaneseq
        %v1756 = vshrl.u32 %v1755, 7
        %v1757 = vsub.s32 %v1754, %v1756
        %v1758 = vrot.slane %v1744, %v1757
        %v1759 = vcombine.low %v1561, %v1565
        %v1760 = vcombine.high %v1561, %v1565
        %v1762 = vunpack.c.l.s4 1983009808
        %v1763 = vunpack.c.0.s8 %v1762
        %v1764 = vlaneseq
        %v1765 = vshrl.u32 %v1764, 7
        %v1766 = vsub.s32 %v1763, %v1765
        %v1767 = vrot.slane %v1759, %v1766
        %v1769 = vunpack.c.l.s4 1983009808
        %v1770 = vunpack.c.0.s8 %v1769
        %v1771 = vlaneseq
        %v1772 = vshrl.u32 %v1771, 7
        %v1773 = vsub.s32 %v1770, %v1772
        %v1774 = vrot.slane %v1760, %v1773
        %v1775 = vcombine.low %v1567, %v1571
        %v1776 = vcombine.high %v1567, %v1571
        %v1778 = vunpack.c.l.s4 1983009808
        %v1779 = vunpack.c.0.s8 %v1778
        %v1780 = vlaneseq
        %v1781 = vshrl.u32 %v1780, 7
        %v1782 = vsub.s32 %v1779, %v1781
        %v1783 = vrot.slane %v1775, %v1782
        %v1785 = vunpack.c.l.s4 1983009808
        %v1786 = vunpack.c.0.s8 %v1785
        %v1787 = vlaneseq
        %v1788 = vshrl.u32 %v1787, 7
        %v1789 = vsub.s32 %v1786, %v1788
        %v1790 = vrot.slane %v1776, %v1789
        %v1791 = vcombine.low %v1569, %v1573
        %v1792 = vcombine.high %v1569, %v1573
        %v1794 = vunpack.c.l.s4 1983009808
        %v1795 = vunpack.c.0.s8 %v1794
        %v1796 = vlaneseq
        %v1797 = vshrl.u32 %v1796, 7
        %v1798 = vsub.s32 %v1795, %v1797
        %v1799 = vrot.slane %v1791, %v1798
        %v1801 = vunpack.c.l.s4 1983009808
        %v1802 = vunpack.c.0.s8 %v1801
        %v1803 = vlaneseq
        %v1804 = vshrl.u32 %v1803, 7
        %v1805 = vsub.s32 %v1802, %v1804
        %v1806 = vrot.slane %v1792, %v1805
        %v1807 = vcombine.low %v1751, %v1767
        %v1808 = vcombine.high %v1751, %v1767
        %v1810 = vunpack.c.l.s4 1934713408
        %v1811 = vunpack.c.0.s8 %v1810
        %v1812 = vlaneseq
        %v1813 = vshrl.u32 %v1812, 7
        %v1814 = vsub.s32 %v1811, %v1813
        %v1815 = vrot.slane %v1807, %v1814
        %v1817 = vunpack.c.l.s4 1934713408
        %v1818 = vunpack.c.0.s8 %v1817
        %v1819 = vlaneseq
        %v1820 = vshrl.u32 %v1819, 7
        %v1821 = vsub.s32 %v1818, %v1820
        %v1822 = vrot.slane %v1808, %v1821
        %v1823 = vcombine.low %v1758, %v1774
        %v1824 = vcombine.high %v1758, %v1774
        %v1826 = vunpack.c.l.s4 1934713408
        %v1827 = vunpack.c.0.s8 %v1826
        %v1828 = vlaneseq
        %v1829 = vshrl.u32 %v1828, 7
        %v1830 = vsub.s32 %v1827, %v1829
        %v1831 = vrot.slane %v1823, %v1830
        %v1833 = vunpack.c.l.s4 1934713408
        %v1834 = vunpack.c.0.s8 %v1833
        %v1835 = vlaneseq
        %v1836 = vshrl.u32 %v1835, 7
        %v1837 = vsub.s32 %v1834, %v1836
        %v1838 = vrot.slane %v1824, %v1837
        %v1839 = vcombine.low %v1783, %v1799
        %v1840 = vcombine.high %v1783, %v1799
        %v1842 = vunpack.c.l.s4 1934713408
        %v1843 = vunpack.c.0.s8 %v1842
        %v1844 = vlaneseq
        %v1845 = vshrl.u32 %v1844, 7
        %v1846 = vsub.s32 %v1843, %v1845
        %v1847 = vrot.slane %v1839, %v1846
        %v1849 = vunpack.c.l.s4 1934713408
        %v1850 = vunpack.c.0.s8 %v1849
        %v1851 = vlaneseq
        %v1852 = vshrl.u32 %v1851, 7
        %v1853 = vsub.s32 %v1850, %v1852
        %v1854 = vrot.slane %v1840, %v1853
        %v1855 = vcombine.low %v1790, %v1806
        %v1856 = vcombine.high %v1790, %v1806
        %v1858 = vunpack.c.l.s4 1934713408
        %v1859 = vunpack.c.0.s8 %v1858
        %v1860 = vlaneseq
        %v1861 = vshrl.u32 %v1860, 7
        %v1862 = vsub.s32 %v1859, %v1861
        %v1863 = vrot.slane %v1855, %v1862
        %v1865 = vunpack.c.l.s4 1934713408
        %v1866 = vunpack.c.0.s8 %v1865
        %v1867 = vlaneseq
        %v1868 = vshrl.u32 %v1867, 7
        %v1869 = vsub.s32 %v1866, %v1868
        %v1870 = vrot.slane %v1856, %v1869
        %v1871 = vcombine.low %v1815, %v1847
        %v1872 = vcombine.high %v1815, %v1847
        %v1873 = vcombine.low %v1822, %v1854
        %v1874 = vcombine.high %v1822, %v1854
        %v1875 = vcombine.low %v1831, %v1863
        %v1876 = vcombine.high %v1831, %v1863
        %v1877 = vcombine.low %v1838, %v1870
        %v1878 = vcombine.high %v1838, %v1870
        %v1879 = vcombine.low %v1575, %v1579
        %v1880 = vcombine.high %v1575, %v1579
        %v1882 = vunpack.c.l.s4 1983009808
        %v1883 = vunpack.c.0.s8 %v1882
        %v1884 = vlaneseq
        %v1885 = vshrl.u32 %v1884, 7
        %v1886 = vsub.s32 %v1883, %v1885
        %v1887 = vrot.slane %v1879, %v1886
        %v1889 = vunpack.c.l.s4 1983009808
        %v1890 = vunpack.c.0.s8 %v1889
        %v1891 = vlaneseq
        %v1892 = vshrl.u32 %v1891, 7
        %v1893 = vsub.s32 %v1890, %v1892
        %v1894 = vrot.slane %v1880, %v1893
        %v1895 = vcombine.low %v1577, %v1581
        %v1896 = vcombine.high %v1577, %v1581
        %v1898 = vunpack.c.l.s4 1983009808
        %v1899 = vunpack.c.0.s8 %v1898
        %v1900 = vlaneseq
        %v1901 = vshrl.u32 %v1900, 7
        %v1902 = vsub.s32 %v1899, %v1901
        %v1903 = vrot.slane %v1895, %v1902
        %v1905 = vunpack.c.l.s4 1983009808
        %v1906 = vunpack.c.0.s8 %v1905
        %v1907 = vlaneseq
        %v1908 = vshrl.u32 %v1907, 7
        %v1909 = vsub.s32 %v1906, %v1908
        %v1910 = vrot.slane %v1896, %v1909
        %v1911 = vcombine.low %v1583, %v1587
        %v1912 = vcombine.high %v1583, %v1587
        %v1914 = vunpack.c.l.s4 1983009808
        %v1915 = vunpack.c.0.s8 %v1914
        %v1916 = vlaneseq
        %v1917 = vshrl.u32 %v1916, 7
        %v1918 = vsub.s32 %v1915, %v1917
        %v1919 = vrot.slane %v1911, %v1918
        %v1921 = vunpack.c.l.s4 1983009808
        %v1922 = vunpack.c.0.s8 %v1921
        %v1923 = vlaneseq
        %v1924 = vshrl.u32 %v1923, 7
        %v1925 = vsub.s32 %v1922, %v1924
        %v1926 = vrot.slane %v1912, %v1925
        %v1927 = vcombine.low %v1585, %v1589
        %v1928 = vcombine.high %v1585, %v1589
        %v1930 = vunpack.c.l.s4 1983009808
        %v1931 = vunpack.c.0.s8 %v1930
        %v1932 = vlaneseq
        %v1933 = vshrl.u32 %v1932, 7
        %v1934 = vsub.s32 %v1931, %v1933
        %v1935 = vrot.slane %v1927, %v1934
        %v1937 = vunpack.c.l.s4 1983009808
        %v1938 = vunpack.c.0.s8 %v1937
        %v1939 = vlaneseq
        %v1940 = vshrl.u32 %v1939, 7
        %v1941 = vsub.s32 %v1938, %v1940
        %v1942 = vrot.slane %v1928, %v1941
        %v1943 = vcombine.low %v1887, %v1903
        %v1944 = vcombine.high %v1887, %v1903
        %v1946 = vunpack.c.l.s4 1934713408
        %v1947 = vunpack.c.0.s8 %v1946
        %v1948 = vlaneseq
        %v1949 = vshrl.u32 %v1948, 7
        %v1950 = vsub.s32 %v1947, %v1949
        %v1951 = vrot.slane %v1943, %v1950
        %v1953 = vunpack.c.l.s4 1934713408
        %v1954 = vunpack.c.0.s8 %v1953
        %v1955 = vlaneseq
        %v1956 = vshrl.u32 %v1955, 7
        %v1957 = vsub.s32 %v1954, %v1956
        %v1958 = vrot.slane %v1944, %v1957
        %v1959 = vcombine.low %v1894, %v1910
        %v1960 = vcombine.high %v1894, %v1910
        %v1962 = vunpack.c.l.s4 1934713408
        %v1963 = vunpack.c.0.s8 %v1962
        %v1964 = vlaneseq
        %v1965 = vshrl.u32 %v1964, 7
        %v1966 = vsub.s32 %v1963, %v1965
        %v1967 = vrot.slane %v1959, %v1966
        %v1969 = vunpack.c.l.s4 1934713408
        %v1970 = vunpack.c.0.s8 %v1969
        %v1971 = vlaneseq
        %v1972 = vshrl.u32 %v1971, 7
        %v1973 = vsub.s32 %v1970, %v1972
        %v1974 = vrot.slane %v1960, %v1973
        %v1975 = vcombine.low %v1919, %v1935
        %v1976 = vcombine.high %v1919, %v1935
        %v1978 = vunpack.c.l.s4 1934713408
        %v1979 = vunpack.c.0.s8 %v1978
        %v1980 = vlaneseq
        %v1981 = vshrl.u32 %v1980, 7
        %v1982 = vsub.s32 %v1979, %v1981
        %v1983 = vrot.slane %v1975, %v1982
        %v1985 = vunpack.c.l.s4 1934713408
        %v1986 = vunpack.c.0.s8 %v1985
        %v1987 = vlaneseq
        %v1988 = vshrl.u32 %v1987, 7
        %v1989 = vsub.s32 %v1986, %v1988
        %v1990 = vrot.slane %v1976, %v1989
        %v1991 = vcombine.low %v1926, %v1942
        %v1992 = vcombine.high %v1926, %v1942
        %v1994 = vunpack.c.l.s4 1934713408
        %v1995 = vunpack.c.0.s8 %v1994
        %v1996 = vlaneseq
        %v1997 = vshrl.u32 %v1996, 7
        %v1998 = vsub.s32 %v1995, %v1997
        %v1999 = vrot.slane %v1991, %v1998
        %v2001 = vunpack.c.l.s4 1934713408
        %v2002 = vunpack.c.0.s8 %v2001
        %v2003 = vlaneseq
        %v2004 = vshrl.u32 %v2003, 7
        %v2005 = vsub.s32 %v2002, %v2004
        %v2006 = vrot.slane %v1992, %v2005
        %v2007 = vcombine.low %v1951, %v1983
        %v2008 = vcombine.high %v1951, %v1983
        %v2009 = vcombine.low %v1958, %v1990
        %v2010 = vcombine.high %v1958, %v1990
        %v2011 = vcombine.low %v1967, %v1999
        %v2012 = vcombine.high %v1967, %v1999
        %v2013 = vcombine.low %v1974, %v2006
        %v2014 = vcombine.high %v1974, %v2006
        %v2015 = vcombine.low %v1591, %v1595
        %v2016 = vcombine.high %v1591, %v1595
        %v2018 = vunpack.c.l.s4 1983009808
        %v2019 = vunpack.c.0.s8 %v2018
        %v2020 = vlaneseq
        %v2021 = vshrl.u32 %v2020, 7
        %v2022 = vsub.s32 %v2019, %v2021
        %v2023 = vrot.slane %v2015, %v2022
        %v2025 = vunpack.c.l.s4 1983009808
        %v2026 = vunpack.c.0.s8 %v2025
        %v2027 = vlaneseq
        %v2028 = vshrl.u32 %v2027, 7
        %v2029 = vsub.s32 %v2026, %v2028
        %v2030 = vrot.slane %v2016, %v2029
        %v2031 = vcombine.low %v1593, %v1597
        %v2032 = vcombine.high %v1593, %v1597
        %v2034 = vunpack.c.l.s4 1983009808
        %v2035 = vunpack.c.0.s8 %v2034
        %v2036 = vlaneseq
        %v2037 = vshrl.u32 %v2036, 7
        %v2038 = vsub.s32 %v2035, %v2037
        %v2039 = vrot.slane %v2031, %v2038
        %v2041 = vunpack.c.l.s4 1983009808
        %v2042 = vunpack.c.0.s8 %v2041
        %v2043 = vlaneseq
        %v2044 = vshrl.u32 %v2043, 7
        %v2045 = vsub.s32 %v2042, %v2044
        %v2046 = vrot.slane %v2032, %v2045
        %v2047 = vcombine.low %v1599, %v1603
        %v2048 = vcombine.high %v1599, %v1603
        %v2050 = vunpack.c.l.s4 1983009808
        %v2051 = vunpack.c.0.s8 %v2050
        %v2052 = vlaneseq
        %v2053 = vshrl.u32 %v2052, 7
        %v2054 = vsub.s32 %v2051, %v2053
        %v2055 = vrot.slane %v2047, %v2054
        %v2057 = vunpack.c.l.s4 1983009808
        %v2058 = vunpack.c.0.s8 %v2057
        %v2059 = vlaneseq
        %v2060 = vshrl.u32 %v2059, 7
        %v2061 = vsub.s32 %v2058, %v2060
        %v2062 = vrot.slane %v2048, %v2061
        %v2063 = vcombine.low %v1601, %v1605
        %v2064 = vcombine.high %v1601, %v1605
        %v2066 = vunpack.c.l.s4 1983009808
        %v2067 = vunpack.c.0.s8 %v2066
        %v2068 = vlaneseq
        %v2069 = vshrl.u32 %v2068, 7
        %v2070 = vsub.s32 %v2067, %v2069
        %v2071 = vrot.slane %v2063, %v2070
        %v2073 = vunpack.c.l.s4 1983009808
        %v2074 = vunpack.c.0.s8 %v2073
        %v2075 = vlaneseq
        %v2076 = vshrl.u32 %v2075, 7
        %v2077 = vsub.s32 %v2074, %v2076
        %v2078 = vrot.slane %v2064, %v2077
        %v2079 = vcombine.low %v2023, %v2039
        %v2080 = vcombine.high %v2023, %v2039
        %v2082 = vunpack.c.l.s4 1934713408
        %v2083 = vunpack.c.0.s8 %v2082
        %v2084 = vlaneseq
        %v2085 = vshrl.u32 %v2084, 7
        %v2086 = vsub.s32 %v2083, %v2085
        %v2087 = vrot.slane %v2079, %v2086
        %v2089 = vunpack.c.l.s4 1934713408
        %v2090 = vunpack.c.0.s8 %v2089
        %v2091 = vlaneseq
        %v2092 = vshrl.u32 %v2091, 7
        %v2093 = vsub.s32 %v2090, %v2092
        %v2094 = vrot.slane %v2080, %v2093
        %v2095 = vcombine.low %v2030, %v2046
        %v2096 = vcombine.high %v2030, %v2046
        %v2098 = vunpack.c.l.s4 1934713408
        %v2099 = vunpack.c.0.s8 %v2098
        %v2100 = vlaneseq
        %v2101 = vshrl.u32 %v2100, 7
        %v2102 = vsub.s32 %v2099, %v2101
        %v2103 = vrot.slane %v2095, %v2102
        %v2105 = vunpack.c.l.s4 1934713408
        %v2106 = vunpack.c.0.s8 %v2105
        %v2107 = vlaneseq
        %v2108 = vshrl.u32 %v2107, 7
        %v2109 = vsub.s32 %v2106, %v2108
        %v2110 = vrot.slane %v2096, %v2109
        %v2111 = vcombine.low %v2055, %v2071
        %v2112 = vcombine.high %v2055, %v2071
        %v2114 = vunpack.c.l.s4 1934713408
        %v2115 = vunpack.c.0.s8 %v2114
        %v2116 = vlaneseq
        %v2117 = vshrl.u32 %v2116, 7
        %v2118 = vsub.s32 %v2115, %v2117
        %v2119 = vrot.slane %v2111, %v2118
        %v2121 = vunpack.c.l.s4 1934713408
        %v2122 = vunpack.c.0.s8 %v2121
        %v2123 = vlaneseq
        %v2124 = vshrl.u32 %v2123, 7
        %v2125 = vsub.s32 %v2122, %v2124
        %v2126 = vrot.slane %v2112, %v2125
        %v2127 = vcombine.low %v2062, %v2078
        %v2128 = vcombine.high %v2062, %v2078
        %v2130 = vunpack.c.l.s4 1934713408
        %v2131 = vunpack.c.0.s8 %v2130
        %v2132 = vlaneseq
        %v2133 = vshrl.u32 %v2132, 7
        %v2134 = vsub.s32 %v2131, %v2133
        %v2135 = vrot.slane %v2127, %v2134
        %v2137 = vunpack.c.l.s4 1934713408
        %v2138 = vunpack.c.0.s8 %v2137
        %v2139 = vlaneseq
        %v2140 = vshrl.u32 %v2139, 7
        %v2141 = vsub.s32 %v2138, %v2140
        %v2142 = vrot.slane %v2128, %v2141
        %v2143 = vcombine.low %v2087, %v2119
        %v2144 = vcombine.high %v2087, %v2119
        %v2145 = vcombine.low %v2094, %v2126
        %v2146 = vcombine.high %v2094, %v2126
        %v2147 = vcombine.low %v2103, %v2135
        %v2148 = vcombine.high %v2103, %v2135
        %v2149 = vcombine.low %v2110, %v2142
        %v2150 = vcombine.high %v2110, %v2142
        %v2151 = vcombine.low %v1544, %v1548
        %v2152 = vcombine.high %v1544, %v1548
        %v2154 = vunpack.c.l.s4 1983009808
        %v2155 = vunpack.c.0.s8 %v2154
        %v2156 = vlaneseq
        %v2157 = vshrl.u32 %v2156, 7
        %v2158 = vsub.s32 %v2155, %v2157
        %v2159 = vrot.slane %v2151, %v2158
        %v2161 = vunpack.c.l.s4 1983009808
        %v2162 = vunpack.c.0.s8 %v2161
        %v2163 = vlaneseq
        %v2164 = vshrl.u32 %v2163, 7
        %v2165 = vsub.s32 %v2162, %v2164
        %v2166 = vrot.slane %v2152, %v2165
        %v2167 = vcombine.low %v1546, %v1550
        %v2168 = vcombine.high %v1546, %v1550
        %v2170 = vunpack.c.l.s4 1983009808
        %v2171 = vunpack.c.0.s8 %v2170
        %v2172 = vlaneseq
        %v2173 = vshrl.u32 %v2172, 7
        %v2174 = vsub.s32 %v2171, %v2173
        %v2175 = vrot.slane %v2167, %v2174
        %v2177 = vunpack.c.l.s4 1983009808
        %v2178 = vunpack.c.0.s8 %v2177
        %v2179 = vlaneseq
        %v2180 = vshrl.u32 %v2179, 7
        %v2181 = vsub.s32 %v2178, %v2180
        %v2182 = vrot.slane %v2168, %v2181
        %v2183 = vcombine.low %v1552, %v1556
        %v2184 = vcombine.high %v1552, %v1556
        %v2186 = vunpack.c.l.s4 1983009808
        %v2187 = vunpack.c.0.s8 %v2186
        %v2188 = vlaneseq
        %v2189 = vshrl.u32 %v2188, 7
        %v2190 = vsub.s32 %v2187, %v2189
        %v2191 = vrot.slane %v2183, %v2190
        %v2193 = vunpack.c.l.s4 1983009808
        %v2194 = vunpack.c.0.s8 %v2193
        %v2195 = vlaneseq
        %v2196 = vshrl.u32 %v2195, 7
        %v2197 = vsub.s32 %v2194, %v2196
        %v2198 = vrot.slane %v2184, %v2197
        %v2199 = vcombine.low %v1554, %v1558
        %v2200 = vcombine.high %v1554, %v1558
        %v2202 = vunpack.c.l.s4 1983009808
        %v2203 = vunpack.c.0.s8 %v2202
        %v2204 = vlaneseq
        %v2205 = vshrl.u32 %v2204, 7
        %v2206 = vsub.s32 %v2203, %v2205
        %v2207 = vrot.slane %v2199, %v2206
        %v2209 = vunpack.c.l.s4 1983009808
        %v2210 = vunpack.c.0.s8 %v2209
        %v2211 = vlaneseq
        %v2212 = vshrl.u32 %v2211, 7
        %v2213 = vsub.s32 %v2210, %v2212
        %v2214 = vrot.slane %v2200, %v2213
        %v2215 = vcombine.low %v2159, %v2175
        %v2216 = vcombine.high %v2159, %v2175
        %v2218 = vunpack.c.l.s4 1934713408
        %v2219 = vunpack.c.0.s8 %v2218
        %v2220 = vlaneseq
        %v2221 = vshrl.u32 %v2220, 7
        %v2222 = vsub.s32 %v2219, %v2221
        %v2223 = vrot.slane %v2215, %v2222
        %v2225 = vunpack.c.l.s4 1934713408
        %v2226 = vunpack.c.0.s8 %v2225
        %v2227 = vlaneseq
        %v2228 = vshrl.u32 %v2227, 7
        %v2229 = vsub.s32 %v2226, %v2228
        %v2230 = vrot.slane %v2216, %v2229
        %v2231 = vcombine.low %v2166, %v2182
        %v2232 = vcombine.high %v2166, %v2182
        %v2234 = vunpack.c.l.s4 1934713408
        %v2235 = vunpack.c.0.s8 %v2234
        %v2236 = vlaneseq
        %v2237 = vshrl.u32 %v2236, 7
        %v2238 = vsub.s32 %v2235, %v2237
        %v2239 = vrot.slane %v2231, %v2238
        %v2241 = vunpack.c.l.s4 1934713408
        %v2242 = vunpack.c.0.s8 %v2241
        %v2243 = vlaneseq
        %v2244 = vshrl.u32 %v2243, 7
        %v2245 = vsub.s32 %v2242, %v2244
        %v2246 = vrot.slane %v2232, %v2245
        %v2247 = vcombine.low %v2191, %v2207
        %v2248 = vcombine.high %v2191, %v2207
        %v2250 = vunpack.c.l.s4 1934713408
        %v2251 = vunpack.c.0.s8 %v2250
        %v2252 = vlaneseq
        %v2253 = vshrl.u32 %v2252, 7
        %v2254 = vsub.s32 %v2251, %v2253
        %v2255 = vrot.slane %v2247, %v2254
        %v2257 = vunpack.c.l.s4 1934713408
        %v2258 = vunpack.c.0.s8 %v2257
        %v2259 = vlaneseq
        %v2260 = vshrl.u32 %v2259, 7
        %v2261 = vsub.s32 %v2258, %v2260
        %v2262 = vrot.slane %v2248, %v2261
        %v2263 = vcombine.low %v2198, %v2214
        %v2264 = vcombine.high %v2198, %v2214
        %v2266 = vunpack.c.l.s4 1934713408
        %v2267 = vunpack.c.0.s8 %v2266
        %v2268 = vlaneseq
        %v2269 = vshrl.u32 %v2268, 7
        %v2270 = vsub.s32 %v2267, %v2269
        %v2271 = vrot.slane %v2263, %v2270
        %v2273 = vunpack.c.l.s4 1934713408
        %v2274 = vunpack.c.0.s8 %v2273
        %v2275 = vlaneseq
        %v2276 = vshrl.u32 %v2275, 7
        %v2277 = vsub.s32 %v2274, %v2276
        %v2278 = vrot.slane %v2264, %v2277
        %v2279 = vcombine.low %v2223, %v2255
        %v2280 = vcombine.high %v2223, %v2255
        %v2281 = vcombine.low %v2230, %v2262
        %v2282 = vcombine.high %v2230, %v2262
        %v2283 = vcombine.low %v2239, %v2271
        %v2284 = vcombine.high %v2239, %v2271
        %v2285 = vcombine.low %v2246, %v2278
        %v2286 = vcombine.high %v2246, %v2278
        %v2287 = vcombine.low %v1560, %v1564
        %v2288 = vcombine.high %v1560, %v1564
        %v2290 = vunpack.c.l.s4 1983009808
        %v2291 = vunpack.c.0.s8 %v2290
        %v2292 = vlaneseq
        %v2293 = vshrl.u32 %v2292, 7
        %v2294 = vsub.s32 %v2291, %v2293
        %v2295 = vrot.slane %v2287, %v2294
        %v2297 = vunpack.c.l.s4 1983009808
        %v2298 = vunpack.c.0.s8 %v2297
        %v2299 = vlaneseq
        %v2300 = vshrl.u32 %v2299, 7
        %v2301 = vsub.s32 %v2298, %v2300
        %v2302 = vrot.slane %v2288, %v2301
        %v2303 = vcombine.low %v1562, %v1566
        %v2304 = vcombine.high %v1562, %v1566
        %v2306 = vunpack.c.l.s4 1983009808
        %v2307 = vunpack.c.0.s8 %v2306
        %v2308 = vlaneseq
        %v2309 = vshrl.u32 %v2308, 7
        %v2310 = vsub.s32 %v2307, %v2309
        %v2311 = vrot.slane %v2303, %v2310
        %v2313 = vunpack.c.l.s4 1983009808
        %v2314 = vunpack.c.0.s8 %v2313
        %v2315 = vlaneseq
        %v2316 = vshrl.u32 %v2315, 7
        %v2317 = vsub.s32 %v2314, %v2316
        %v2318 = vrot.slane %v2304, %v2317
        %v2319 = vcombine.low %v1568, %v1572
        %v2320 = vcombine.high %v1568, %v1572
        %v2322 = vunpack.c.l.s4 1983009808
        %v2323 = vunpack.c.0.s8 %v2322
        %v2324 = vlaneseq
        %v2325 = vshrl.u32 %v2324, 7
        %v2326 = vsub.s32 %v2323, %v2325
        %v2327 = vrot.slane %v2319, %v2326
        %v2329 = vunpack.c.l.s4 1983009808
        %v2330 = vunpack.c.0.s8 %v2329
        %v2331 = vlaneseq
        %v2332 = vshrl.u32 %v2331, 7
        %v2333 = vsub.s32 %v2330, %v2332
        %v2334 = vrot.slane %v2320, %v2333
        %v2335 = vcombine.low %v1570, %v1574
        %v2336 = vcombine.high %v1570, %v1574
        %v2338 = vunpack.c.l.s4 1983009808
        %v2339 = vunpack.c.0.s8 %v2338
        %v2340 = vlaneseq
        %v2341 = vshrl.u32 %v2340, 7
        %v2342 = vsub.s32 %v2339, %v2341
        %v2343 = vrot.slane %v2335, %v2342
        %v2345 = vunpack.c.l.s4 1983009808
        %v2346 = vunpack.c.0.s8 %v2345
        %v2347 = vlaneseq
        %v2348 = vshrl.u32 %v2347, 7
        %v2349 = vsub.s32 %v2346, %v2348
        %v2350 = vrot.slane %v2336, %v2349
        %v2351 = vcombine.low %v2295, %v2311
        %v2352 = vcombine.high %v2295, %v2311
        %v2354 = vunpack.c.l.s4 1934713408
        %v2355 = vunpack.c.0.s8 %v2354
        %v2356 = vlaneseq
        %v2357 = vshrl.u32 %v2356, 7
        %v2358 = vsub.s32 %v2355, %v2357
        %v2359 = vrot.slane %v2351, %v2358
        %v2361 = vunpack.c.l.s4 1934713408
        %v2362 = vunpack.c.0.s8 %v2361
        %v2363 = vlaneseq
        %v2364 = vshrl.u32 %v2363, 7
        %v2365 = vsub.s32 %v2362, %v2364
        %v2366 = vrot.slane %v2352, %v2365
        %v2367 = vcombine.low %v2302, %v2318
        %v2368 = vcombine.high %v2302, %v2318
        %v2370 = vunpack.c.l.s4 1934713408
        %v2371 = vunpack.c.0.s8 %v2370
        %v2372 = vlaneseq
        %v2373 = vshrl.u32 %v2372, 7
        %v2374 = vsub.s32 %v2371, %v2373
        %v2375 = vrot.slane %v2367, %v2374
        %v2377 = vunpack.c.l.s4 1934713408
        %v2378 = vunpack.c.0.s8 %v2377
        %v2379 = vlaneseq
        %v2380 = vshrl.u32 %v2379, 7
        %v2381 = vsub.s32 %v2378, %v2380
        %v2382 = vrot.slane %v2368, %v2381
        %v2383 = vcombine.low %v2327, %v2343
        %v2384 = vcombine.high %v2327, %v2343
        %v2386 = vunpack.c.l.s4 1934713408
        %v2387 = vunpack.c.0.s8 %v2386
        %v2388 = vlaneseq
        %v2389 = vshrl.u32 %v2388, 7
        %v2390 = vsub.s32 %v2387, %v2389
        %v2391 = vrot.slane %v2383, %v2390
        %v2393 = vunpack.c.l.s4 1934713408
        %v2394 = vunpack.c.0.s8 %v2393
        %v2395 = vlaneseq
        %v2396 = vshrl.u32 %v2395, 7
        %v2397 = vsub.s32 %v2394, %v2396
        %v2398 = vrot.slane %v2384, %v2397
        %v2399 = vcombine.low %v2334, %v2350
        %v2400 = vcombine.high %v2334, %v2350
        %v2402 = vunpack.c.l.s4 1934713408
        %v2403 = vunpack.c.0.s8 %v2402
        %v2404 = vlaneseq
        %v2405 = vshrl.u32 %v2404, 7
        %v2406 = vsub.s32 %v2403, %v2405
        %v2407 = vrot.slane %v2399, %v2406
        %v2409 = vunpack.c.l.s4 1934713408
        %v2410 = vunpack.c.0.s8 %v2409
        %v2411 = vlaneseq
        %v2412 = vshrl.u32 %v2411, 7
        %v2413 = vsub.s32 %v2410, %v2412
        %v2414 = vrot.slane %v2400, %v2413
        %v2415 = vcombine.low %v2359, %v2391
        %v2416 = vcombine.high %v2359, %v2391
        %v2417 = vcombine.low %v2366, %v2398
        %v2418 = vcombine.high %v2366, %v2398
        %v2419 = vcombine.low %v2375, %v2407
        %v2420 = vcombine.high %v2375, %v2407
        %v2421 = vcombine.low %v2382, %v2414
        %v2422 = vcombine.high %v2382, %v2414
        %v2423 = vcombine.low %v1576, %v1580
        %v2424 = vcombine.high %v1576, %v1580
        %v2426 = vunpack.c.l.s4 1983009808
        %v2427 = vunpack.c.0.s8 %v2426
        %v2428 = vlaneseq
        %v2429 = vshrl.u32 %v2428, 7
        %v2430 = vsub.s32 %v2427, %v2429
        %v2431 = vrot.slane %v2423, %v2430
        %v2433 = vunpack.c.l.s4 1983009808
        %v2434 = vunpack.c.0.s8 %v2433
        %v2435 = vlaneseq
        %v2436 = vshrl.u32 %v2435, 7
        %v2437 = vsub.s32 %v2434, %v2436
        %v2438 = vrot.slane %v2424, %v2437
        %v2439 = vcombine.low %v1578, %v1582
        %v2440 = vcombine.high %v1578, %v1582
        %v2442 = vunpack.c.l.s4 1983009808
        %v2443 = vunpack.c.0.s8 %v2442
        %v2444 = vlaneseq
        %v2445 = vshrl.u32 %v2444, 7
        %v2446 = vsub.s32 %v2443, %v2445
        %v2447 = vrot.slane %v2439, %v2446
        %v2449 = vunpack.c.l.s4 1983009808
        %v2450 = vunpack.c.0.s8 %v2449
        %v2451 = vlaneseq
        %v2452 = vshrl.u32 %v2451, 7
        %v2453 = vsub.s32 %v2450, %v2452
        %v2454 = vrot.slane %v2440, %v2453
        %v2455 = vcombine.low %v1584, %v1588
        %v2456 = vcombine.high %v1584, %v1588
        %v2458 = vunpack.c.l.s4 1983009808
        %v2459 = vunpack.c.0.s8 %v2458
        %v2460 = vlaneseq
        %v2461 = vshrl.u32 %v2460, 7
        %v2462 = vsub.s32 %v2459, %v2461
        %v2463 = vrot.slane %v2455, %v2462
        %v2465 = vunpack.c.l.s4 1983009808
        %v2466 = vunpack.c.0.s8 %v2465
        %v2467 = vlaneseq
        %v2468 = vshrl.u32 %v2467, 7
        %v2469 = vsub.s32 %v2466, %v2468
        %v2470 = vrot.slane %v2456, %v2469
        %v2471 = vcombine.low %v1586, %v1590
        %v2472 = vcombine.high %v1586, %v1590
        %v2474 = vunpack.c.l.s4 1983009808
        %v2475 = vunpack.c.0.s8 %v2474
        %v2476 = vlaneseq
        %v2477 = vshrl.u32 %v2476, 7
        %v2478 = vsub.s32 %v2475, %v2477
        %v2479 = vrot.slane %v2471, %v2478
        %v2481 = vunpack.c.l.s4 1983009808
        %v2482 = vunpack.c.0.s8 %v2481
        %v2483 = vlaneseq
        %v2484 = vshrl.u32 %v2483, 7
        %v2485 = vsub.s32 %v2482, %v2484
        %v2486 = vrot.slane %v2472, %v2485
        %v2487 = vcombine.low %v2431, %v2447
        %v2488 = vcombine.high %v2431, %v2447
        %v2490 = vunpack.c.l.s4 1934713408
        %v2491 = vunpack.c.0.s8 %v2490
        %v2492 = vlaneseq
        %v2493 = vshrl.u32 %v2492, 7
        %v2494 = vsub.s32 %v2491, %v2493
        %v2495 = vrot.slane %v2487, %v2494
        %v2497 = vunpack.c.l.s4 1934713408
        %v2498 = vunpack.c.0.s8 %v2497
        %v2499 = vlaneseq
        %v2500 = vshrl.u32 %v2499, 7
        %v2501 = vsub.s32 %v2498, %v2500
        %v2502 = vrot.slane %v2488, %v2501
        %v2503 = vcombine.low %v2438, %v2454
        %v2504 = vcombine.high %v2438, %v2454
        %v2506 = vunpack.c.l.s4 1934713408
        %v2507 = vunpack.c.0.s8 %v2506
        %v2508 = vlaneseq
        %v2509 = vshrl.u32 %v2508, 7
        %v2510 = vsub.s32 %v2507, %v2509
        %v2511 = vrot.slane %v2503, %v2510
        %v2513 = vunpack.c.l.s4 1934713408
        %v2514 = vunpack.c.0.s8 %v2513
        %v2515 = vlaneseq
        %v2516 = vshrl.u32 %v2515, 7
        %v2517 = vsub.s32 %v2514, %v2516
        %v2518 = vrot.slane %v2504, %v2517
        %v2519 = vcombine.low %v2463, %v2479
        %v2520 = vcombine.high %v2463, %v2479
        %v2522 = vunpack.c.l.s4 1934713408
        %v2523 = vunpack.c.0.s8 %v2522
        %v2524 = vlaneseq
        %v2525 = vshrl.u32 %v2524, 7
        %v2526 = vsub.s32 %v2523, %v2525
        %v2527 = vrot.slane %v2519, %v2526
        %v2529 = vunpack.c.l.s4 1934713408
        %v2530 = vunpack.c.0.s8 %v2529
        %v2531 = vlaneseq
        %v2532 = vshrl.u32 %v2531, 7
        %v2533 = vsub.s32 %v2530, %v2532
        %v2534 = vrot.slane %v2520, %v2533
        %v2535 = vcombine.low %v2470, %v2486
        %v2536 = vcombine.high %v2470, %v2486
        %v2538 = vunpack.c.l.s4 1934713408
        %v2539 = vunpack.c.0.s8 %v2538
        %v2540 = vlaneseq
        %v2541 = vshrl.u32 %v2540, 7
        %v2542 = vsub.s32 %v2539, %v2541
        %v2543 = vrot.slane %v2535, %v2542
        %v2545 = vunpack.c.l.s4 1934713408
        %v2546 = vunpack.c.0.s8 %v2545
        %v2547 = vlaneseq
        %v2548 = vshrl.u32 %v2547, 7
        %v2549 = vsub.s32 %v2546, %v2548
        %v2550 = vrot.slane %v2536, %v2549
        %v2551 = vcombine.low %v2495, %v2527
        %v2552 = vcombine.high %v2495, %v2527
        %v2553 = vcombine.low %v2502, %v2534
        %v2554 = vcombine.high %v2502, %v2534
        %v2555 = vcombine.low %v2511, %v2543
        %v2556 = vcombine.high %v2511, %v2543
        %v2557 = vcombine.low %v2518, %v2550
        %v2558 = vcombine.high %v2518, %v2550
        %v2559 = vcombine.low %v1592, %v1596
        %v2560 = vcombine.high %v1592, %v1596
        %v2562 = vunpack.c.l.s4 1983009808
        %v2563 = vunpack.c.0.s8 %v2562
        %v2564 = vlaneseq
        %v2565 = vshrl.u32 %v2564, 7
        %v2566 = vsub.s32 %v2563, %v2565
        %v2567 = vrot.slane %v2559, %v2566
        %v2569 = vunpack.c.l.s4 1983009808
        %v2570 = vunpack.c.0.s8 %v2569
        %v2571 = vlaneseq
        %v2572 = vshrl.u32 %v2571, 7
        %v2573 = vsub.s32 %v2570, %v2572
        %v2574 = vrot.slane %v2560, %v2573
        %v2575 = vcombine.low %v1594, %v1598
        %v2576 = vcombine.high %v1594, %v1598
        %v2578 = vunpack.c.l.s4 1983009808
        %v2579 = vunpack.c.0.s8 %v2578
        %v2580 = vlaneseq
        %v2581 = vshrl.u32 %v2580, 7
        %v2582 = vsub.s32 %v2579, %v2581
        %v2583 = vrot.slane %v2575, %v2582
        %v2585 = vunpack.c.l.s4 1983009808
        %v2586 = vunpack.c.0.s8 %v2585
        %v2587 = vlaneseq
        %v2588 = vshrl.u32 %v2587, 7
        %v2589 = vsub.s32 %v2586, %v2588
        %v2590 = vrot.slane %v2576, %v2589
        %v2591 = vcombine.low %v1600, %v1604
        %v2592 = vcombine.high %v1600, %v1604
        %v2594 = vunpack.c.l.s4 1983009808
        %v2595 = vunpack.c.0.s8 %v2594
        %v2596 = vlaneseq
        %v2597 = vshrl.u32 %v2596, 7
        %v2598 = vsub.s32 %v2595, %v2597
        %v2599 = vrot.slane %v2591, %v2598
        %v2601 = vunpack.c.l.s4 1983009808
        %v2602 = vunpack.c.0.s8 %v2601
        %v2603 = vlaneseq
        %v2604 = vshrl.u32 %v2603, 7
        %v2605 = vsub.s32 %v2602, %v2604
        %v2606 = vrot.slane %v2592, %v2605
        %v2607 = vcombine.low %v1602, %v1606
        %v2608 = vcombine.high %v1602, %v1606
        %v2610 = vunpack.c.l.s4 1983009808
        %v2611 = vunpack.c.0.s8 %v2610
        %v2612 = vlaneseq
        %v2613 = vshrl.u32 %v2612, 7
        %v2614 = vsub.s32 %v2611, %v2613
        %v2615 = vrot.slane %v2607, %v2614
        %v2617 = vunpack.c.l.s4 1983009808
        %v2618 = vunpack.c.0.s8 %v2617
        %v2619 = vlaneseq
        %v2620 = vshrl.u32 %v2619, 7
        %v2621 = vsub.s32 %v2618, %v2620
        %v2622 = vrot.slane %v2608, %v2621
        %v2623 = vcombine.low %v2567, %v2583
        %v2624 = vcombine.high %v2567, %v2583
        %v2626 = vunpack.c.l.s4 1934713408
        %v2627 = vunpack.c.0.s8 %v2626
        %v2628 = vlaneseq
        %v2629 = vshrl.u32 %v2628, 7
        %v2630 = vsub.s32 %v2627, %v2629
        %v2631 = vrot.slane %v2623, %v2630
        %v2633 = vunpack.c.l.s4 1934713408
        %v2634 = vunpack.c.0.s8 %v2633
        %v2635 = vlaneseq
        %v2636 = vshrl.u32 %v2635, 7
        %v2637 = vsub.s32 %v2634, %v2636
        %v2638 = vrot.slane %v2624, %v2637
        %v2639 = vcombine.low %v2574, %v2590
        %v2640 = vcombine.high %v2574, %v2590
        %v2642 = vunpack.c.l.s4 1934713408
        %v2643 = vunpack.c.0.s8 %v2642
        %v2644 = vlaneseq
        %v2645 = vshrl.u32 %v2644, 7
        %v2646 = vsub.s32 %v2643, %v2645
        %v2647 = vrot.slane %v2639, %v2646
        %v2649 = vunpack.c.l.s4 1934713408
        %v2650 = vunpack.c.0.s8 %v2649
        %v2651 = vlaneseq
        %v2652 = vshrl.u32 %v2651, 7
        %v2653 = vsub.s32 %v2650, %v2652
        %v2654 = vrot.slane %v2640, %v2653
        %v2655 = vcombine.low %v2599, %v2615
        %v2656 = vcombine.high %v2599, %v2615
        %v2658 = vunpack.c.l.s4 1934713408
        %v2659 = vunpack.c.0.s8 %v2658
        %v2660 = vlaneseq
        %v2661 = vshrl.u32 %v2660, 7
        %v2662 = vsub.s32 %v2659, %v2661
        %v2663 = vrot.slane %v2655, %v2662
        %v2665 = vunpack.c.l.s4 1934713408
        %v2666 = vunpack.c.0.s8 %v2665
        %v2667 = vlaneseq
        %v2668 = vshrl.u32 %v2667, 7
        %v2669 = vsub.s32 %v2666, %v2668
        %v2670 = vrot.slane %v2656, %v2669
        %v2671 = vcombine.low %v2606, %v2622
        %v2672 = vcombine.high %v2606, %v2622
        %v2674 = vunpack.c.l.s4 1934713408
        %v2675 = vunpack.c.0.s8 %v2674
        %v2676 = vlaneseq
        %v2677 = vshrl.u32 %v2676, 7
        %v2678 = vsub.s32 %v2675, %v2677
        %v2679 = vrot.slane %v2671, %v2678
        %v2681 = vunpack.c.l.s4 1934713408
        %v2682 = vunpack.c.0.s8 %v2681
        %v2683 = vlaneseq
        %v2684 = vshrl.u32 %v2683, 7
        %v2685 = vsub.s32 %v2682, %v2684
        %v2686 = vrot.slane %v2672, %v2685
        %v2687 = vcombine.low %v2631, %v2663
        %v2688 = vcombine.high %v2631, %v2663
        %v2689 = vcombine.low %v2638, %v2670
        %v2690 = vcombine.high %v2638, %v2670
        %v2691 = vcombine.low %v2647, %v2679
        %v2692 = vcombine.high %v2647, %v2679
        %v2693 = vcombine.low %v2654, %v2686
        %v2694 = vcombine.high %v2654, %v2686
        %2699 = vrot.lane.b32.xlu0 %v1736, 2
        %v2700 = vpop.permute.xlu0 %2699
        %2701 = vrot.lane.b32.xlu0 %v1872, 2
        %v2702 = vpop.permute.xlu0 %2701
        %2703 = vrot.lane.b32.xlu0 %v2008, 2
        %v2704 = vpop.permute.xlu0 %2703
        %2705 = vrot.lane.b32.xlu0 %v2144, 2
        %v2706 = vpop.permute.xlu0 %2705
        %2715 = vrot.lane.b32.xlu0 %v1737, 4
        %v2716 = vpop.permute.xlu0 %2715
        %2717 = vrot.lane.b32.xlu0 %v1873, 4
        %v2718 = vpop.permute.xlu0 %2717
        %2719 = vrot.lane.b32.xlu0 %v2009, 4
        %v2720 = vpop.permute.xlu0 %2719
        %2721 = vrot.lane.b32.xlu0 %v2145, 4
        %v2722 = vpop.permute.xlu0 %2721
        %2731 = vrot.lane.b32.xlu0 %v1738, 6
        %v2732 = vpop.permute.xlu0 %2731
        %2733 = vrot.lane.b32.xlu0 %v1874, 6
        %v2734 = vpop.permute.xlu0 %2733
        %2735 = vrot.lane.b32.xlu0 %v2010, 6
        %v2736 = vpop.permute.xlu0 %2735
        %2737 = vrot.lane.b32.xlu0 %v2146, 6
        %v2738 = vpop.permute.xlu0 %2737
        %2747 = vrot.lane.b32.xlu0 %v1739, 8
        %v2748 = vpop.permute.xlu0 %2747
        %2749 = vrot.lane.b32.xlu0 %v1875, 8
        %v2750 = vpop.permute.xlu0 %2749
        %2751 = vrot.lane.b32.xlu0 %v2011, 8
        %v2752 = vpop.permute.xlu0 %2751
        %2753 = vrot.lane.b32.xlu0 %v2147, 8
        %v2754 = vpop.permute.xlu0 %2753
        %2763 = vrot.lane.b32.xlu0 %v1740, 10
        %v2764 = vpop.permute.xlu0 %2763
        %2765 = vrot.lane.b32.xlu0 %v1876, 10
        %v2766 = vpop.permute.xlu0 %2765
        %2767 = vrot.lane.b32.xlu0 %v2012, 10
        %v2768 = vpop.permute.xlu0 %2767
        %2769 = vrot.lane.b32.xlu0 %v2148, 10
        %v2770 = vpop.permute.xlu0 %2769
        %2779 = vrot.lane.b32.xlu0 %v1741, 12
        %v2780 = vpop.permute.xlu0 %2779
        %2781 = vrot.lane.b32.xlu0 %v1877, 12
        %v2782 = vpop.permute.xlu0 %2781
        %2783 = vrot.lane.b32.xlu0 %v2013, 12
        %v2784 = vpop.permute.xlu0 %2783
        %2785 = vrot.lane.b32.xlu0 %v2149, 12
        %v2786 = vpop.permute.xlu0 %2785
        %2795 = vrot.lane.b32.xlu0 %v1742, 14
        %v2796 = vpop.permute.xlu0 %2795
        %2797 = vrot.lane.b32.xlu0 %v1878, 14
        %v2798 = vpop.permute.xlu0 %2797
        %2799 = vrot.lane.b32.xlu0 %v2014, 14
        %v2800 = vpop.permute.xlu0 %2799
        %2801 = vrot.lane.b32.xlu0 %v2150, 14
        %v2802 = vpop.permute.xlu0 %2801
        %2811 = vrot.lane.b32.xlu0 %v2279, 16
        %v2812 = vpop.permute.xlu0 %2811
        %2813 = vrot.lane.b32.xlu0 %v2415, 16
        %v2814 = vpop.permute.xlu0 %2813
        %2815 = vrot.lane.b32.xlu0 %v2551, 16
        %v2816 = vpop.permute.xlu0 %2815
        %2817 = vrot.lane.b32.xlu0 %v2687, 16
        %v2818 = vpop.permute.xlu0 %2817
        %2827 = vrot.lane.b32.xlu0 %v2280, 18
        %v2828 = vpop.permute.xlu0 %2827
        %2829 = vrot.lane.b32.xlu0 %v2416, 18
        %v2830 = vpop.permute.xlu0 %2829
        %2831 = vrot.lane.b32.xlu0 %v2552, 18
        %v2832 = vpop.permute.xlu0 %2831
        %2833 = vrot.lane.b32.xlu0 %v2688, 18
        %v2834 = vpop.permute.xlu0 %2833
        %2843 = vrot.lane.b32.xlu0 %v2281, 20
        %v2844 = vpop.permute.xlu0 %2843
        %2845 = vrot.lane.b32.xlu0 %v2417, 20
        %v2846 = vpop.permute.xlu0 %2845
        %2847 = vrot.lane.b32.xlu0 %v2553, 20
        %v2848 = vpop.permute.xlu0 %2847
        %2849 = vrot.lane.b32.xlu0 %v2689, 20
        %v2850 = vpop.permute.xlu0 %2849
        %2859 = vrot.lane.b32.xlu0 %v2282, 22
        %v2860 = vpop.permute.xlu0 %2859
        %2861 = vrot.lane.b32.xlu0 %v2418, 22
        %v2862 = vpop.permute.xlu0 %2861
        %2863 = vrot.lane.b32.xlu0 %v2554, 22
        %v2864 = vpop.permute.xlu0 %2863
        %2865 = vrot.lane.b32.xlu0 %v2690, 22
        %v2866 = vpop.permute.xlu0 %2865
        %2875 = vrot.lane.b32.xlu0 %v2283, 24
        %v2876 = vpop.permute.xlu0 %2875
        %2877 = vrot.lane.b32.xlu0 %v2419, 24
        %v2878 = vpop.permute.xlu0 %2877
        %2879 = vrot.lane.b32.xlu0 %v2555, 24
        %v2880 = vpop.permute.xlu0 %2879
        %2881 = vrot.lane.b32.xlu0 %v2691, 24
        %v2882 = vpop.permute.xlu0 %2881
        %2891 = vrot.lane.b32.xlu0 %v2284, 26
        %v2892 = vpop.permute.xlu0 %2891
        %2893 = vrot.lane.b32.xlu0 %v2420, 26
        %v2894 = vpop.permute.xlu0 %2893
        %2895 = vrot.lane.b32.xlu0 %v2556, 26
        %v2896 = vpop.permute.xlu0 %2895
        %2897 = vrot.lane.b32.xlu0 %v2692, 26
        %v2898 = vpop.permute.xlu0 %2897
        %2907 = vrot.lane.b32.xlu0 %v2285, 28
        %v2908 = vpop.permute.xlu0 %2907
        %2909 = vrot.lane.b32.xlu0 %v2421, 28
        %v2910 = vpop.permute.xlu0 %2909
        %2911 = vrot.lane.b32.xlu0 %v2557, 28
        %v2912 = vpop.permute.xlu0 %2911
        %2913 = vrot.lane.b32.xlu0 %v2693, 28
        %v2914 = vpop.permute.xlu0 %2913
        %2923 = vrot.lane.b32.xlu0 %v2286, 30
        %v2924 = vpop.permute.xlu0 %2923
        %2925 = vrot.lane.b32.xlu0 %v2422, 30
        %v2926 = vpop.permute.xlu0 %2925
        %2927 = vrot.lane.b32.xlu0 %v2558, 30
        %v2928 = vpop.permute.xlu0 %2927
        %2929 = vrot.lane.b32.xlu0 %v2694, 30
        %v2930 = vpop.permute.xlu0 %2929
        %vm2935 = vcmask 15360
        %v2936 = vsel %vm2935, %v1735, %v2700
        %v2937 = vsel %vm2935, %v1871, %v2702
        %v2938 = vsel %vm2935, %v2007, %v2704
        %v2939 = vsel %vm2935, %v2143, %v2706
        %vm2940 = vcmask 31744
        %v2941 = vsel %vm2940, %v2936, %v2716
        %v2942 = vsel %vm2940, %v2937, %v2718
        %v2943 = vsel %vm2940, %v2938, %v2720
        %v2944 = vsel %vm2940, %v2939, %v2722
        %vm2945 = vcmask 48128
        %v2946 = vsel %vm2945, %v2941, %v2732
        %v2947 = vsel %vm2945, %v2942, %v2734
        %v2948 = vsel %vm2945, %v2943, %v2736
        %v2949 = vsel %vm2945, %v2944, %v2738
        %vm2950 = vcmask 64512
        %v2951 = vsel %vm2950, %v2946, %v2748
        %v2952 = vsel %vm2950, %v2947, %v2750
        %v2953 = vsel %vm2950, %v2948, %v2752
        %v2954 = vsel %vm2950, %v2949, %v2754
        %vm2955 = vcmask 80896
        %v2956 = vsel %vm2955, %v2951, %v2764
        %v2957 = vsel %vm2955, %v2952, %v2766
        %v2958 = vsel %vm2955, %v2953, %v2768
        %v2959 = vsel %vm2955, %v2954, %v2770
        %vm2960 = vcmask 97280
        %v2961 = vsel %vm2960, %v2956, %v2780
        %v2962 = vsel %vm2960, %v2957, %v2782
        %v2963 = vsel %vm2960, %v2958, %v2784
        %v2964 = vsel %vm2960, %v2959, %v2786
        %vm2965 = vcmask 113664
        %v2966 = vsel %vm2965, %v2961, %v2796
        %v2967 = vsel %vm2965, %v2962, %v2798
        %v2968 = vsel %vm2965, %v2963, %v2800
        %v2969 = vsel %vm2965, %v2964, %v2802
        %vm2970 = vcmask 130048
        %v2971 = vsel %vm2970, %v2966, %v2812
        %v2972 = vsel %vm2970, %v2967, %v2814
        %v2973 = vsel %vm2970, %v2968, %v2816
        %v2974 = vsel %vm2970, %v2969, %v2818
        %vm2975 = vcmask 146432
        %v2976 = vsel %vm2975, %v2971, %v2828
        %v2977 = vsel %vm2975, %v2972, %v2830
        %v2978 = vsel %vm2975, %v2973, %v2832
        %v2979 = vsel %vm2975, %v2974, %v2834
        %vm2980 = vcmask 162816
        %v2981 = vsel %vm2980, %v2976, %v2844
        %v2982 = vsel %vm2980, %v2977, %v2846
        %v2983 = vsel %vm2980, %v2978, %v2848
        %v2984 = vsel %vm2980, %v2979, %v2850
        %vm2985 = vcmask 179200
        %v2986 = vsel %vm2985, %v2981, %v2860
        %v2987 = vsel %vm2985, %v2982, %v2862
        %v2988 = vsel %vm2985, %v2983, %v2864
        %v2989 = vsel %vm2985, %v2984, %v2866
        %vm2990 = vcmask 195584
        %v2991 = vsel %vm2990, %v2986, %v2876
        %v2992 = vsel %vm2990, %v2987, %v2878
        %v2993 = vsel %vm2990, %v2988, %v2880
        %v2994 = vsel %vm2990, %v2989, %v2882
        %vm2995 = vcmask 211968
        %v2996 = vsel %vm2995, %v2991, %v2892
        %v2997 = vsel %vm2995, %v2992, %v2894
        %v2998 = vsel %vm2995, %v2993, %v2896
        %v2999 = vsel %vm2995, %v2994, %v2898
        %vm3000 = vcmask 228352
        %v3001 = vsel %vm3000, %v2996, %v2908
        %v3002 = vsel %vm3000, %v2997, %v2910
        %v3003 = vsel %vm3000, %v2998, %v2912
        %v3004 = vsel %vm3000, %v2999, %v2914
        %vm3005 = vcmask 244736
        %v3006 = vsel %vm3005, %v3001, %v2924
        %v3007 = vsel %vm3005, %v3002, %v2926
        %v3008 = vsel %vm3005, %v3003, %v2928
        %v3009 = vsel %vm3005, %v3004, %v2930
        %vm3010 = vcmask 261120
        %3011 = vst.msk [vmem:[%s177] sm:$0xff] %vm3010, %v3006
        %3012 = vst.msk [vmem:[%s177 + $0x8] sm:$0xff] %vm3010, %v3007
        %3013 = vst.msk [vmem:[%s177 + $0x10] sm:$0xff] %vm3010, %v3008
        %3014 = vst.msk [vmem:[%s177 + $0x18] sm:$0xff] %vm3010, %v3009
        %s3015 = sand.u32 %s68, 1
        %s3016 = scalar_lea.sflag [#allocation4], %s3015
        %s3017 = sand.u32 %s68, 1
        %s3018 = smul.addr %s3017, 32
        %s3019 = scalar_lea.vmem [#allocation5], %s3018
        // Predicated region
        $region29: #{tpu_custom_call.1} parent=23 // pred_check
          %p3020 = pneg %p78
        $region30: #{tpu_custom_call.1} parent=23 // pred_check_branch
          %3022 = sbr.rel (%p3020) target = $region32
        $region31: #{tpu_custom_call.1} parent=23 // pred_region
          %s3024 = ssub.s32 512, 512
          %3025 = vsyncadd %s3016, %s3024
          %s3026 = smul.addr %s23, 4
          %s3027 = smul.addr %s22, 8
          %s3028 = sadd.s32 %s3026, %s3027
          %s3029 = smul.addr %s3028, 128
          %s3030 = scalar_lea.hbm %s1, %s3029
          %s3031 = sshll.u32 %s3019, 4
          %s3032 = int_to_ptr.vmem [resolvable:$true] %s3031
          %3037 = dma.vmem_to_hbm [thread:$0]  %s3032, 512, %s3030, %s3016, 128, 128, 8
        $region32: #{tpu_custom_call.1} parent=23 // pred_fallthru
          _
      $region24: #{tpu_custom_call.1} parent=5 // pred_fallthru
        _
      %p3038 = scmp.le.s32.totalorder 2, %s13
      // Predicated region
      $region33: #{tpu_custom_call.1} parent=5 // pred_check
        %p3039 = pneg %p3038
      $region34: #{tpu_custom_call.1} parent=5 // pred_check_branch
        %3041 = sbr.rel (%p3039) target = $region36
      $region35: #{tpu_custom_call.1} parent=5 // pred_region
        %s3042 = ssub.s32 %s13, 2
        // Predicated region
        $region37: #{tpu_custom_call.1} parent=35 // pred_check
          %p3043 = pneg %p84
        $region38: #{tpu_custom_call.1} parent=35 // pred_check_branch
          %3045 = sbr.rel (%p3043) target = $region40
        $region39: #{tpu_custom_call.1} parent=35 // pred_region
          %s3046 = sand.u32 %s69, 1
          %s3047 = scalar_lea.sflag [#allocation4], %s3046
          %s3048 = sand.u32 %s69, 1
          %s3049 = smul.addr %s3048, 32
          %s3050 = scalar_lea.vmem [#allocation5], %s3049
          %3051 = dma.done %s3047, 512
        $region40: #{tpu_custom_call.1} parent=35 // pred_fallthru
          _
      $region36: #{tpu_custom_call.1} parent=5 // pred_fallthru
        _
    $region6: #{tpu_custom_call.1} parent=1 // loop_footer
      %s17 = sadd.s32 1, %s13
    $region7: #{tpu_custom_call.1} parent=1 // loop_footer_branch
      %12 = sbr.rel target = $region3
    $region8: #{tpu_custom_call.1} parent=1 // loop_exit
      _
    %3052 = vsyncpa [#allocation3], 1
    %s3053 = scalar_lea.sflag [#allocation3], 1
    %3054 = vsyncpa %s3053, 1
    %3055 = vsyncpa [#allocation4], 1
    %s3056 = scalar_lea.sflag [#allocation4], 1
    %3057 = vsyncpa %s3056, 1

</llo_original>
